<compile_context>
chip_gen: v7x
topology: tpu7x:2x2x1
jax: 0.10.0
libtpu: 0.0.40
codegen_flags: <defaults>
</compile_context>

<pallas_src>
import numpy as np
import jax
import jax.numpy as jnp
from jax.experimental import pallas as pl
from jax.experimental.pallas import tpu as pltpu


# ----------------------------------------------------------------------------
# Host-side glue: exact 1-D bilinear (align_corners=True) interpolation matrix
# ----------------------------------------------------------------------------
def _interp_matrix(n_out, n_in):
    """Row-stochastic matrix M (n_out, n_in) s.t. M @ v == 1-D bilinear
    upsample of v with align_corners=True (PyTorch semantics)."""
    if n_out == 1 or n_in == 1:
        m = np.zeros((n_out, n_in), np.float32)
        m[:, 0] = 1.0
        return m
    src = np.arange(n_out) * (n_in - 1) / (n_out - 1)
    i0 = np.clip(np.floor(src).astype(np.int64), 0, n_in - 1)
    i1 = np.clip(i0 + 1, 0, n_in - 1)
    f = (src - i0).astype(np.float32)
    m = np.zeros((n_out, n_in), np.float32)
    m[np.arange(n_out), i0] += (1.0 - f)
    m[np.arange(n_out), i1] += f
    return m


# ----------------------------------------------------------------------------
# Wrapper: parameter folding + layout prep + pallas_call
# ----------------------------------------------------------------------------
def up_forward(x1, x2, w1, w2, g1, be1, mu1, v1, g2, be2, mu2, v2, eps=1e-5):
    """Forward pass of Up(bilinear=True) in eval mode.  NCHW in / NCHW out."""
    N, C1, H1, W1 = x1.shape
    N2, C2, H2, W2 = x2.shape
    Cmid, Cin = w1.shape[0], w1.shape[1]
    Cout = w2.shape[0]
    assert N2 == N and Cin == C1 + C2 and w2.shape[1] == Cmid
    diffY, diffX = H2 - 2 * H1, W2 - 2 * W1
    assert diffY >= 0 and diffX >= 0, "x2 must be at least as large as 2*x1"

    Hp, Wp = H2 + 2, W2 + 2            # 1-pixel conv-padding ring
    P = Hp * Wp                        # flattened padded grid (on lanes)
    MARGIN = 2 * Wp                    # room for the +-(Wp+1) im2col offsets
    He = Hp + 4                        # padded grid + 2 extra zero rows each side
    E = He * Wp                        # == P + 2*MARGIN

    # ---- constants: separable interpolation (+F.pad offset, conv pad, margins)
    mh = _interp_matrix(2 * H1, H1)                        # (2*H1, H1)
    mw = _interp_matrix(2 * W1, W1)                        # (2*W1, W1)
    mh_e = np.zeros((He, H1), np.float32)
    mh_e[3 + diffY // 2: 3 + diffY // 2 + 2 * H1, :] = mh
    mw_p = np.zeros((Wp, W1), np.float32)
    mw_p[1 + diffX // 2: 1 + diffX // 2 + 2 * W1, :] = mw
    mwT = jnp.asarray(mw_p.T)                              # (W1, Wp)
    # static per-output-row taps for the height upsample (<=2 nonzeros per row)
    taps = [[(a, float(mh_e[r, a])) for a in range(H1) if mh_e[r, a] != 0.0]
            for r in range(He)]
    # group consecutive all-zero rows so the lane-axis concat has fewer pieces
    row_groups = []                                        # ('zero', n) | ('row', r)
    r = 0
    while r < He:
        if not taps[r]:
            z = r
            while r < He and not taps[r]:
                r += 1
            row_groups.append(("zero", r - z))
        else:
            row_groups.append(("row", r))
            r += 1

    # interior mask over the padded-flat grid (re-creates conv padding for conv2)
    mask2d = np.zeros((Hp, Wp), np.float32)
    mask2d[1:H2 + 1, 1:W2 + 1] = 1.0
    mask = jnp.asarray(mask2d.reshape(1, P))

    # ---- fold eval-mode BatchNorm into the conv weights (scale) + bias column
    s1 = g1 / jnp.sqrt(v1 + eps)
    s2 = g2 / jnp.sqrt(v2 + eps)
    w1f = (jnp.transpose(w1, (0, 2, 3, 1)).reshape(Cmid, 9 * Cin)
           * s1[:, None]).astype(jnp.float32)              # (Cmid, 9*Cin)
    w2f = (jnp.transpose(w2, (0, 2, 3, 1)).reshape(Cout, 9 * Cmid)
           * s2[:, None]).astype(jnp.float32)              # (Cout, 9*Cmid)
    b1c = (be1 - mu1 * s1).reshape(Cmid, 1).astype(jnp.float32)
    b2c = (be2 - mu2 * s2).reshape(Cout, 1).astype(jnp.float32)

    # ---- activations: x1 as (N, C1*H1, W1); x2 padded (+margins) and flattened
    x1r = x1.reshape(N, C1 * H1, W1)
    x2e = jnp.pad(x2, ((0, 0), (0, 0), (3, 3), (1, 1))).reshape(N, C2, E)

    # im2col lane offsets for the 9 taps of a 3x3 conv on the flattened grid
    offs = [MARGIN + dy * Wp + dx for dy in (-1, 0, 1) for dx in (-1, 0, 1)]

    def kernel(x1_ref, x2e_ref, mwT_ref, mask_ref,
               w1_ref, b1_ref, w2_ref, b2_ref, o_ref):
        # ---- separable bilinear upsample + F.pad, produced directly in the
        #      margin-extended flattened padded-grid layout -------------------
        a = jnp.dot(x1_ref[0], mwT_ref[...],
                    preferred_element_type=jnp.float32)        # (C1*H1, Wp)
        a3 = a.reshape(C1, H1, Wp)
        pieces = []
        for kind, val in row_groups:                           # static unroll
            if kind == "zero":
                pieces.append(jnp.zeros((C1, val * Wp), jnp.float32))
            else:
                t = taps[val]
                acc = t[0][1] * a3[:, t[0][0], :]
                for (src, wgt) in t[1:]:
                    acc = acc + wgt * a3[:, src, :]
                pieces.append(acc)
        up_flat = jnp.concatenate(pieces, axis=1)              # (C1, E)

        # ---- conv1: im2col (9 constant-offset lane slices) + ONE matmul -----
        xin = jnp.concatenate([x2e_ref[0], up_flat], axis=0)   # (Cin, E)
        cols1 = jnp.concatenate([xin[:, o:o + P] for o in offs], axis=0)
        acc1 = jnp.dot(w1_ref[...], cols1,
                       preferred_element_type=jnp.float32)     # (Cmid, P)
        # folded-BN bias + ReLU, then re-zero the padding ring for conv2
        y1 = jnp.maximum(acc1 + b1_ref[...], 0.0) * mask_ref[...]

        # ---- conv2: same im2col trick on y1 ---------------------------------
        zpad = jnp.zeros((Cmid, MARGIN), jnp.float32)
        y1e = jnp.concatenate([zpad, y1, zpad], axis=1)        # (Cmid, E)
        cols2 = jnp.concatenate([y1e[:, o:o + P] for o in offs], axis=0)
        acc2 = jnp.dot(w2_ref[...], cols2,
                       preferred_element_type=jnp.float32)     # (Cout, P)
        o_ref[0] = jnp.maximum(acc2 + b2_ref[...], 0.0).astype(o_ref.dtype)

    out_p = pl.pallas_call(
        kernel,
        out_shape=jax.ShapeDtypeStruct((N, Cout, P), jnp.float32),
        grid_spec=pltpu.PrefetchScalarGridSpec(
            num_scalar_prefetch=0,
            grid=(N,),
            in_specs=[
                pl.BlockSpec((1, C1 * H1, W1), lambda n: (n, 0, 0)),
                pl.BlockSpec((1, C2, E), lambda n: (n, 0, 0)),
                pl.BlockSpec((W1, Wp), lambda n: (0, 0)),
                pl.BlockSpec((1, P), lambda n: (0, 0)),
                pl.BlockSpec((Cmid, 9 * Cin), lambda n: (0, 0)),
                pl.BlockSpec((Cmid, 1), lambda n: (0, 0)),
                pl.BlockSpec((Cout, 9 * Cmid), lambda n: (0, 0)),
                pl.BlockSpec((Cout, 1), lambda n: (0, 0)),
            ],
            out_specs=pl.BlockSpec((1, Cout, P), lambda n: (n, 0, 0)),
        ),
        compiler_params=pltpu.CompilerParams(
            dimension_semantics=("parallel",)),
    )(x1r, x2e, mwT, mask, w1f, b1c, w2f, b2c)

    # strip the conv-padding ring and return NCHW
    return out_p.reshape(N, Cout, Hp, Wp)[:, :, 1:H2 + 1, 1:W2 + 1]


# ----------------------------------------------------------------------------
# Pure-JAX reference (eval-mode BN) for correctness checking
# ----------------------------------------------------------------------------
def _reference_up(x1, x2, w1, w2, g1, be1, mu1, v1, g2, be2, mu2, v2, eps):
    _, _, H1, W1 = x1.shape
    _, _, H2, W2 = x2.shape
    mh = jnp.asarray(_interp_matrix(2 * H1, H1))
    mw = jnp.asarray(_interp_matrix(2 * W1, W1))
    up = jnp.einsum('ha,wb,ncab->nchw', mh, mw, x1)
    diffY, diffX = H2 - 2 * H1, W2 - 2 * W1
    up = jnp.pad(up, ((0, 0), (0, 0),
                      (diffY // 2, diffY - diffY // 2),
                      (diffX // 2, diffX - diffX // 2)))
    x = jnp.concatenate([x2, up], axis=1)

    def conv_bn_relu(x, w, g, be, mu, v):
        y = jax.lax.conv_general_dilated(
            x, w, (1, 1), 'SAME', dimension_numbers=('NCHW', 'OIHW', 'NCHW'))
        y = (y - mu[None, :, None, None]) / jnp.sqrt(v[None, :, None, None] + eps)
        y = y * g[None, :, None, None] + be[None, :, None, None]
        return jnp.maximum(y, 0.0)

    y = conv_bn_relu(x, w1, g1, be1, mu1, v1)
    return conv_bn_relu(y, w2, g2, be2, mu2, v2)


if __name__ == "__main__":
    # Up(in_channels=8, out_channels=4, bilinear=True):
    #   x1: (N, in_channels//2, H, W)   decoder feature (half spatial size)
    #   x2: (N, in_channels//2, 2H, 2W) skip connection
    N = 2
    in_channels, out_channels = 8, 4
    C1 = in_channels // 2
    C2 = in_channels // 2
    Cmid = in_channels // 2            # DoubleConv mid_channels (bilinear path)
    H1 = W1 = 8
    H2 = W2 = 16
    eps = 1e-5

    key = jax.random.PRNGKey(0)
    ks = jax.random.split(key, 12)
    x1 = jax.random.normal(ks[0], (N, C1, H1, W1), jnp.float32)
    x2 = jax.random.normal(ks[1], (N, C2, H2, W2), jnp.float32)

    # Conv weights (PyTorch OIHW layout), deterministic synthetic init
    w1 = jax.random.normal(ks[2], (Cmid, in_channels, 3, 3), jnp.float32) * 0.2
    w2 = jax.random.normal(ks[3], (out_channels, Cmid, 3, 3), jnp.float32) * 0.2
    # BatchNorm (eval mode) parameters / running stats
    g1 = 0.5 + jax.random.uniform(ks[4], (Cmid,), jnp.float32)
    be1 = jax.random.normal(ks[5], (Cmid,), jnp.float32) * 0.1
    mu1 = jax.random.normal(ks[6], (Cmid,), jnp.float32) * 0.1
    v1 = 0.5 + jax.random.uniform(ks[7], (Cmid,), jnp.float32)
    g2 = 0.5 + jax.random.uniform(ks[8], (out_channels,), jnp.float32)
    be2 = jax.random.normal(ks[9], (out_channels,), jnp.float32) * 0.1
    mu2 = jax.random.normal(ks[10], (out_channels,), jnp.float32) * 0.1
    v2 = 0.5 + jax.random.uniform(ks[11], (out_channels,), jnp.float32)

    out = up_forward(x1, x2, w1, w2, g1, be1, mu1, v1, g2, be2, mu2, v2, eps)
    out = jax.block_until_ready(out)

    ref = _reference_up(x1, x2, w1, w2, g1, be1, mu1, v1, g2, be2, mu2, v2, eps)
    ref = jax.block_until_ready(ref)

    assert out.shape == (N, out_channels, H2, W2), out.shape
    max_err = float(jnp.max(jnp.abs(out - ref)))
    if not bool(jnp.allclose(out, ref, atol=1e-3, rtol=1e-3)):
        raise SystemExit(f"Pallas result mismatch vs reference (max abs err {max_err})")
    print("KERNEL_OK")
</pallas_src>

<mosaic_0001>
module attributes {stable_mosaic.version = 11 : i64} {
  func.func @kernel(%arg0: i32, %arg1: memref<1x32x8xf32, #tpu.memory_space<vmem>>, %arg2: memref<1x4x396xf32, #tpu.memory_space<vmem>>, %arg3: memref<8x18xf32, #tpu.memory_space<vmem>>, %arg4: memref<1x324xf32, #tpu.memory_space<vmem>>, %arg5: memref<4x72xf32, #tpu.memory_space<vmem>>, %arg6: memref<4x1xf32, #tpu.memory_space<vmem>>, %arg7: memref<4x36xf32, #tpu.memory_space<vmem>>, %arg8: memref<4x1xf32, #tpu.memory_space<vmem>>, %arg9: memref<1x4x324xf32, #tpu.memory_space<vmem>>) attributes {dimension_semantics = [#tpu.dimension_semantics<parallel>], iteration_bounds = array<i64: 2>, scalar_prefetch = 0 : i64, scratch_operands = 0 : i64, tpu.core_type = #tpu.core_type<tc>, window_params = [{transform_indices = @transform_0, window_bounds = array<i64: 1, 32, 8>}, {transform_indices = @transform_1, window_bounds = array<i64: 1, 4, 396>}, {pipeline_mode = #tpu.pipeline_mode<synchronous>, transform_indices = @transform_2, window_bounds = array<i64: 8, 18>}, {pipeline_mode = #tpu.pipeline_mode<synchronous>, transform_indices = @transform_3, window_bounds = array<i64: 1, 324>}, {pipeline_mode = #tpu.pipeline_mode<synchronous>, transform_indices = @transform_4, window_bounds = array<i64: 4, 72>}, {pipeline_mode = #tpu.pipeline_mode<synchronous>, transform_indices = @transform_5, window_bounds = array<i64: 4, 1>}, {pipeline_mode = #tpu.pipeline_mode<synchronous>, transform_indices = @transform_6, window_bounds = array<i64: 4, 36>}, {pipeline_mode = #tpu.pipeline_mode<synchronous>, transform_indices = @transform_7, window_bounds = array<i64: 4, 1>}, {transform_indices = @transform_8, window_bounds = array<i64: 1, 4, 324>}]} {
    %c0 = arith.constant 0 : index
    %c0_0 = arith.constant 0 : index
    %c0_1 = arith.constant 0 : index
    %0 = vector.load %arg1[%c0, %c0_0, %c0_1] : memref<1x32x8xf32, #tpu.memory_space<vmem>>, vector<1x32x8xf32>
    %1 = vector.shape_cast %0 : vector<1x32x8xf32> to vector<32x8xf32>
    %c0_2 = arith.constant 0 : index
    %c0_3 = arith.constant 0 : index
    %2 = vector.load %arg3[%c0_2, %c0_3] : memref<8x18xf32, #tpu.memory_space<vmem>>, vector<8x18xf32>
    %cst = arith.constant dense<0.000000e+00> : vector<32x18xf32>
    %3 = tpu.matmul %1, %2, %cst {dimension_numbers = #tpu.dot_dimension_numbers<[1], [0], [0], [1], [0, 0, 1, 1], [], []>} : vector<32x8xf32>, vector<8x18xf32>, vector<32x18xf32> -> vector<32x18xf32>
    %4 = vector.shape_cast %3 : vector<32x18xf32> to vector<4x8x18xf32>
    %cst_4 = arith.constant 0.000000e+00 : f32
    %5 = vector.broadcast %cst_4 : f32 to vector<4x54xf32>
    %6 = vector.extract_strided_slice %4 {offsets = [0, 0, 0], sizes = [4, 1, 18], strides = [1, 1, 1]} : vector<4x8x18xf32> to vector<4x1x18xf32>
    %7 = vector.shape_cast %6 : vector<4x1x18xf32> to vector<4x18xf32>
    %cst_5 = arith.constant 1.000000e+00 : f32
    %8 = vector.broadcast %cst_5 : f32 to vector<4x18xf32>
    %9 = arith.mulf %8, %7 : vector<4x18xf32>
    %10 = vector.extract_strided_slice %4 {offsets = [0, 0, 0], sizes = [4, 1, 18], strides = [1, 1, 1]} : vector<4x8x18xf32> to vector<4x1x18xf32>
    %11 = vector.shape_cast %10 : vector<4x1x18xf32> to vector<4x18xf32>
    %cst_6 = arith.constant 0.533333302 : f32
    %12 = vector.broadcast %cst_6 : f32 to vector<4x18xf32>
    %13 = arith.mulf %12, %11 : vector<4x18xf32>
    %14 = vector.extract_strided_slice %4 {offsets = [0, 1, 0], sizes = [4, 1, 18], strides = [1, 1, 1]} : vector<4x8x18xf32> to vector<4x1x18xf32>
    %15 = vector.shape_cast %14 : vector<4x1x18xf32> to vector<4x18xf32>
    %cst_7 = arith.constant 0.466666669 : f32
    %16 = vector.broadcast %cst_7 : f32 to vector<4x18xf32>
    %17 = arith.mulf %16, %15 : vector<4x18xf32>
    %18 = arith.addf %13, %17 : vector<4x18xf32>
    %19 = vector.extract_strided_slice %4 {offsets = [0, 0, 0], sizes = [4, 1, 18], strides = [1, 1, 1]} : vector<4x8x18xf32> to vector<4x1x18xf32>
    %20 = vector.shape_cast %19 : vector<4x1x18xf32> to vector<4x18xf32>
    %cst_8 = arith.constant 0.0666666627 : f32
    %21 = vector.broadcast %cst_8 : f32 to vector<4x18xf32>
    %22 = arith.mulf %21, %20 : vector<4x18xf32>
    %23 = vector.extract_strided_slice %4 {offsets = [0, 1, 0], sizes = [4, 1, 18], strides = [1, 1, 1]} : vector<4x8x18xf32> to vector<4x1x18xf32>
    %24 = vector.shape_cast %23 : vector<4x1x18xf32> to vector<4x18xf32>
    %cst_9 = arith.constant 0.933333337 : f32
    %25 = vector.broadcast %cst_9 : f32 to vector<4x18xf32>
    %26 = arith.mulf %25, %24 : vector<4x18xf32>
    %27 = arith.addf %22, %26 : vector<4x18xf32>
    %28 = vector.extract_strided_slice %4 {offsets = [0, 1, 0], sizes = [4, 1, 18], strides = [1, 1, 1]} : vector<4x8x18xf32> to vector<4x1x18xf32>
    %29 = vector.shape_cast %28 : vector<4x1x18xf32> to vector<4x18xf32>
    %cst_10 = arith.constant 6.000000e-01 : f32
    %30 = vector.broadcast %cst_10 : f32 to vector<4x18xf32>
    %31 = arith.mulf %30, %29 : vector<4x18xf32>
    %32 = vector.extract_strided_slice %4 {offsets = [0, 2, 0], sizes = [4, 1, 18], strides = [1, 1, 1]} : vector<4x8x18xf32> to vector<4x1x18xf32>
    %33 = vector.shape_cast %32 : vector<4x1x18xf32> to vector<4x18xf32>
    %cst_11 = arith.constant 4.000000e-01 : f32
    %34 = vector.broadcast %cst_11 : f32 to vector<4x18xf32>
    %35 = arith.mulf %34, %33 : vector<4x18xf32>
    %36 = arith.addf %31, %35 : vector<4x18xf32>
    %37 = vector.extract_strided_slice %4 {offsets = [0, 1, 0], sizes = [4, 1, 18], strides = [1, 1, 1]} : vector<4x8x18xf32> to vector<4x1x18xf32>
    %38 = vector.shape_cast %37 : vector<4x1x18xf32> to vector<4x18xf32>
    %cst_12 = arith.constant 0.133333325 : f32
    %39 = vector.broadcast %cst_12 : f32 to vector<4x18xf32>
    %40 = arith.mulf %39, %38 : vector<4x18xf32>
    %41 = vector.extract_strided_slice %4 {offsets = [0, 2, 0], sizes = [4, 1, 18], strides = [1, 1, 1]} : vector<4x8x18xf32> to vector<4x1x18xf32>
    %42 = vector.shape_cast %41 : vector<4x1x18xf32> to vector<4x18xf32>
    %cst_13 = arith.constant 0.866666674 : f32
    %43 = vector.broadcast %cst_13 : f32 to vector<4x18xf32>
    %44 = arith.mulf %43, %42 : vector<4x18xf32>
    %45 = arith.addf %40, %44 : vector<4x18xf32>
    %46 = vector.extract_strided_slice %4 {offsets = [0, 2, 0], sizes = [4, 1, 18], strides = [1, 1, 1]} : vector<4x8x18xf32> to vector<4x1x18xf32>
    %47 = vector.shape_cast %46 : vector<4x1x18xf32> to vector<4x18xf32>
    %cst_14 = arith.constant 0.666666627 : f32
    %48 = vector.broadcast %cst_14 : f32 to vector<4x18xf32>
    %49 = arith.mulf %48, %47 : vector<4x18xf32>
    %50 = vector.extract_strided_slice %4 {offsets = [0, 3, 0], sizes = [4, 1, 18], strides = [1, 1, 1]} : vector<4x8x18xf32> to vector<4x1x18xf32>
    %51 = vector.shape_cast %50 : vector<4x1x18xf32> to vector<4x18xf32>
    %cst_15 = arith.constant 0.333333343 : f32
    %52 = vector.broadcast %cst_15 : f32 to vector<4x18xf32>
    %53 = arith.mulf %52, %51 : vector<4x18xf32>
    %54 = arith.addf %49, %53 : vector<4x18xf32>
    %55 = vector.extract_strided_slice %4 {offsets = [0, 2, 0], sizes = [4, 1, 18], strides = [1, 1, 1]} : vector<4x8x18xf32> to vector<4x1x18xf32>
    %56 = vector.shape_cast %55 : vector<4x1x18xf32> to vector<4x18xf32>
    %cst_16 = arith.constant 0.199999988 : f32
    %57 = vector.broadcast %cst_16 : f32 to vector<4x18xf32>
    %58 = arith.mulf %57, %56 : vector<4x18xf32>
    %59 = vector.extract_strided_slice %4 {offsets = [0, 3, 0], sizes = [4, 1, 18], strides = [1, 1, 1]} : vector<4x8x18xf32> to vector<4x1x18xf32>
    %60 = vector.shape_cast %59 : vector<4x1x18xf32> to vector<4x18xf32>
    %cst_17 = arith.constant 8.000000e-01 : f32
    %61 = vector.broadcast %cst_17 : f32 to vector<4x18xf32>
    %62 = arith.mulf %61, %60 : vector<4x18xf32>
    %63 = arith.addf %58, %62 : vector<4x18xf32>
    %64 = vector.extract_strided_slice %4 {offsets = [0, 3, 0], sizes = [4, 1, 18], strides = [1, 1, 1]} : vector<4x8x18xf32> to vector<4x1x18xf32>
    %65 = vector.shape_cast %64 : vector<4x1x18xf32> to vector<4x18xf32>
    %cst_18 = arith.constant 0.733333349 : f32
    %66 = vector.broadcast %cst_18 : f32 to vector<4x18xf32>
    %67 = arith.mulf %66, %65 : vector<4x18xf32>
    %68 = vector.extract_strided_slice %4 {offsets = [0, 4, 0], sizes = [4, 1, 18], strides = [1, 1, 1]} : vector<4x8x18xf32> to vector<4x1x18xf32>
    %69 = vector.shape_cast %68 : vector<4x1x18xf32> to vector<4x18xf32>
    %cst_19 = arith.constant 0.266666681 : f32
    %70 = vector.broadcast %cst_19 : f32 to vector<4x18xf32>
    %71 = arith.mulf %70, %69 : vector<4x18xf32>
    %72 = arith.addf %67, %71 : vector<4x18xf32>
    %73 = vector.extract_strided_slice %4 {offsets = [0, 3, 0], sizes = [4, 1, 18], strides = [1, 1, 1]} : vector<4x8x18xf32> to vector<4x1x18xf32>
    %74 = vector.shape_cast %73 : vector<4x1x18xf32> to vector<4x18xf32>
    %cst_20 = arith.constant 0.266666651 : f32
    %75 = vector.broadcast %cst_20 : f32 to vector<4x18xf32>
    %76 = arith.mulf %75, %74 : vector<4x18xf32>
    %77 = vector.extract_strided_slice %4 {offsets = [0, 4, 0], sizes = [4, 1, 18], strides = [1, 1, 1]} : vector<4x8x18xf32> to vector<4x1x18xf32>
    %78 = vector.shape_cast %77 : vector<4x1x18xf32> to vector<4x18xf32>
    %cst_21 = arith.constant 0.733333349 : f32
    %79 = vector.broadcast %cst_21 : f32 to vector<4x18xf32>
    %80 = arith.mulf %79, %78 : vector<4x18xf32>
    %81 = arith.addf %76, %80 : vector<4x18xf32>
    %82 = vector.extract_strided_slice %4 {offsets = [0, 4, 0], sizes = [4, 1, 18], strides = [1, 1, 1]} : vector<4x8x18xf32> to vector<4x1x18xf32>
    %83 = vector.shape_cast %82 : vector<4x1x18xf32> to vector<4x18xf32>
    %cst_22 = arith.constant 8.000000e-01 : f32
    %84 = vector.broadcast %cst_22 : f32 to vector<4x18xf32>
    %85 = arith.mulf %84, %83 : vector<4x18xf32>
    %86 = vector.extract_strided_slice %4 {offsets = [0, 5, 0], sizes = [4, 1, 18], strides = [1, 1, 1]} : vector<4x8x18xf32> to vector<4x1x18xf32>
    %87 = vector.shape_cast %86 : vector<4x1x18xf32> to vector<4x18xf32>
    %cst_23 = arith.constant 2.000000e-01 : f32
    %88 = vector.broadcast %cst_23 : f32 to vector<4x18xf32>
    %89 = arith.mulf %88, %87 : vector<4x18xf32>
    %90 = arith.addf %85, %89 : vector<4x18xf32>
    %91 = vector.extract_strided_slice %4 {offsets = [0, 4, 0], sizes = [4, 1, 18], strides = [1, 1, 1]} : vector<4x8x18xf32> to vector<4x1x18xf32>
    %92 = vector.shape_cast %91 : vector<4x1x18xf32> to vector<4x18xf32>
    %cst_24 = arith.constant 0.333333313 : f32
    %93 = vector.broadcast %cst_24 : f32 to vector<4x18xf32>
    %94 = arith.mulf %93, %92 : vector<4x18xf32>
    %95 = vector.extract_strided_slice %4 {offsets = [0, 5, 0], sizes = [4, 1, 18], strides = [1, 1, 1]} : vector<4x8x18xf32> to vector<4x1x18xf32>
    %96 = vector.shape_cast %95 : vector<4x1x18xf32> to vector<4x18xf32>
    %cst_25 = arith.constant 0.666666686 : f32
    %97 = vector.broadcast %cst_25 : f32 to vector<4x18xf32>
    %98 = arith.mulf %97, %96 : vector<4x18xf32>
    %99 = arith.addf %94, %98 : vector<4x18xf32>
    %100 = vector.extract_strided_slice %4 {offsets = [0, 5, 0], sizes = [4, 1, 18], strides = [1, 1, 1]} : vector<4x8x18xf32> to vector<4x1x18xf32>
    %101 = vector.shape_cast %100 : vector<4x1x18xf32> to vector<4x18xf32>
    %cst_26 = arith.constant 0.866666674 : f32
    %102 = vector.broadcast %cst_26 : f32 to vector<4x18xf32>
    %103 = arith.mulf %102, %101 : vector<4x18xf32>
    %104 = vector.extract_strided_slice %4 {offsets = [0, 6, 0], sizes = [4, 1, 18], strides = [1, 1, 1]} : vector<4x8x18xf32> to vector<4x1x18xf32>
    %105 = vector.shape_cast %104 : vector<4x1x18xf32> to vector<4x18xf32>
    %cst_27 = arith.constant 0.13333334 : f32
    %106 = vector.broadcast %cst_27 : f32 to vector<4x18xf32>
    %107 = arith.mulf %106, %105 : vector<4x18xf32>
    %108 = arith.addf %103, %107 : vector<4x18xf32>
    %109 = vector.extract_strided_slice %4 {offsets = [0, 5, 0], sizes = [4, 1, 18], strides = [1, 1, 1]} : vector<4x8x18xf32> to vector<4x1x18xf32>
    %110 = vector.shape_cast %109 : vector<4x1x18xf32> to vector<4x18xf32>
    %cst_28 = arith.constant 0.399999976 : f32
    %111 = vector.broadcast %cst_28 : f32 to vector<4x18xf32>
    %112 = arith.mulf %111, %110 : vector<4x18xf32>
    %113 = vector.extract_strided_slice %4 {offsets = [0, 6, 0], sizes = [4, 1, 18], strides = [1, 1, 1]} : vector<4x8x18xf32> to vector<4x1x18xf32>
    %114 = vector.shape_cast %113 : vector<4x1x18xf32> to vector<4x18xf32>
    %cst_29 = arith.constant 6.000000e-01 : f32
    %115 = vector.broadcast %cst_29 : f32 to vector<4x18xf32>
    %116 = arith.mulf %115, %114 : vector<4x18xf32>
    %117 = arith.addf %112, %116 : vector<4x18xf32>
    %118 = vector.extract_strided_slice %4 {offsets = [0, 6, 0], sizes = [4, 1, 18], strides = [1, 1, 1]} : vector<4x8x18xf32> to vector<4x1x18xf32>
    %119 = vector.shape_cast %118 : vector<4x1x18xf32> to vector<4x18xf32>
    %cst_30 = arith.constant 0.933333337 : f32
    %120 = vector.broadcast %cst_30 : f32 to vector<4x18xf32>
    %121 = arith.mulf %120, %119 : vector<4x18xf32>
    %122 = vector.extract_strided_slice %4 {offsets = [0, 7, 0], sizes = [4, 1, 18], strides = [1, 1, 1]} : vector<4x8x18xf32> to vector<4x1x18xf32>
    %123 = vector.shape_cast %122 : vector<4x1x18xf32> to vector<4x18xf32>
    %cst_31 = arith.constant 0.0666666701 : f32
    %124 = vector.broadcast %cst_31 : f32 to vector<4x18xf32>
    %125 = arith.mulf %124, %123 : vector<4x18xf32>
    %126 = arith.addf %121, %125 : vector<4x18xf32>
    %127 = vector.extract_strided_slice %4 {offsets = [0, 6, 0], sizes = [4, 1, 18], strides = [1, 1, 1]} : vector<4x8x18xf32> to vector<4x1x18xf32>
    %128 = vector.shape_cast %127 : vector<4x1x18xf32> to vector<4x18xf32>
    %cst_32 = arith.constant 0.466666639 : f32
    %129 = vector.broadcast %cst_32 : f32 to vector<4x18xf32>
    %130 = arith.mulf %129, %128 : vector<4x18xf32>
    %131 = vector.extract_strided_slice %4 {offsets = [0, 7, 0], sizes = [4, 1, 18], strides = [1, 1, 1]} : vector<4x8x18xf32> to vector<4x1x18xf32>
    %132 = vector.shape_cast %131 : vector<4x1x18xf32> to vector<4x18xf32>
    %cst_33 = arith.constant 0.533333361 : f32
    %133 = vector.broadcast %cst_33 : f32 to vector<4x18xf32>
    %134 = arith.mulf %133, %132 : vector<4x18xf32>
    %135 = arith.addf %130, %134 : vector<4x18xf32>
    %136 = vector.extract_strided_slice %4 {offsets = [0, 7, 0], sizes = [4, 1, 18], strides = [1, 1, 1]} : vector<4x8x18xf32> to vector<4x1x18xf32>
    %137 = vector.shape_cast %136 : vector<4x1x18xf32> to vector<4x18xf32>
    %cst_34 = arith.constant 1.000000e+00 : f32
    %138 = vector.broadcast %cst_34 : f32 to vector<4x18xf32>
    %139 = arith.mulf %138, %137 : vector<4x18xf32>
    %cst_35 = arith.constant 0.000000e+00 : f32
    %140 = vector.broadcast %cst_35 : f32 to vector<4x54xf32>
    %141 = tpu.concatenate %5, %9, %18, %27, %36, %45, %54, %63, %72, %81, %90, %99, %108, %117, %126, %135 in 1 : vector<4x54xf32>, vector<4x18xf32>, vector<4x18xf32>, vector<4x18xf32>, vector<4x18xf32>, vector<4x18xf32>, vector<4x18xf32>, vector<4x18xf32>, vector<4x18xf32>, vector<4x18xf32>, vector<4x18xf32>, vector<4x18xf32>, vector<4x18xf32>, vector<4x18xf32>, vector<4x18xf32>, vector<4x18xf32> -> vector<4x324xf32>
    %142 = tpu.concatenate %139, %140 in 1 : vector<4x18xf32>, vector<4x54xf32> -> vector<4x72xf32>
    %143 = tpu.concatenate %141, %142 in 1 : vector<4x324xf32>, vector<4x72xf32> -> vector<4x396xf32>
    %c0_36 = arith.constant 0 : index
    %c0_37 = arith.constant 0 : index
    %c0_38 = arith.constant 0 : index
    %144 = vector.load %arg2[%c0_36, %c0_37, %c0_38] : memref<1x4x396xf32, #tpu.memory_space<vmem>>, vector<1x4x396xf32>
    %145 = vector.shape_cast %144 : vector<1x4x396xf32> to vector<4x396xf32>
    %146 = tpu.concatenate %145, %143 in 0 : vector<4x396xf32>, vector<4x396xf32> -> vector<8x396xf32>
    %147 = vector.extract_strided_slice %146 {offsets = [0, 17], sizes = [8, 324], strides = [1, 1]} : vector<8x396xf32> to vector<8x324xf32>
    %148 = vector.extract_strided_slice %146 {offsets = [0, 18], sizes = [8, 324], strides = [1, 1]} : vector<8x396xf32> to vector<8x324xf32>
    %149 = vector.extract_strided_slice %146 {offsets = [0, 19], sizes = [8, 324], strides = [1, 1]} : vector<8x396xf32> to vector<8x324xf32>
    %150 = vector.extract_strided_slice %146 {offsets = [0, 35], sizes = [8, 324], strides = [1, 1]} : vector<8x396xf32> to vector<8x324xf32>
    %151 = vector.extract_strided_slice %146 {offsets = [0, 36], sizes = [8, 324], strides = [1, 1]} : vector<8x396xf32> to vector<8x324xf32>
    %152 = vector.extract_strided_slice %146 {offsets = [0, 37], sizes = [8, 324], strides = [1, 1]} : vector<8x396xf32> to vector<8x324xf32>
    %153 = vector.extract_strided_slice %146 {offsets = [0, 53], sizes = [8, 324], strides = [1, 1]} : vector<8x396xf32> to vector<8x324xf32>
    %154 = vector.extract_strided_slice %146 {offsets = [0, 54], sizes = [8, 324], strides = [1, 1]} : vector<8x396xf32> to vector<8x324xf32>
    %155 = vector.extract_strided_slice %146 {offsets = [0, 55], sizes = [8, 324], strides = [1, 1]} : vector<8x396xf32> to vector<8x324xf32>
    %156 = tpu.concatenate %147, %148, %149, %150, %151, %152, %153, %154, %155 in 0 : vector<8x324xf32>, vector<8x324xf32>, vector<8x324xf32>, vector<8x324xf32>, vector<8x324xf32>, vector<8x324xf32>, vector<8x324xf32>, vector<8x324xf32>, vector<8x324xf32> -> vector<72x324xf32>
    %c0_39 = arith.constant 0 : index
    %c0_40 = arith.constant 0 : index
    %157 = vector.load %arg5[%c0_39, %c0_40] : memref<4x72xf32, #tpu.memory_space<vmem>>, vector<4x72xf32>
    %cst_41 = arith.constant dense<0.000000e+00> : vector<4x324xf32>
    %158 = tpu.matmul %157, %156, %cst_41 {dimension_numbers = #tpu.dot_dimension_numbers<[1], [0], [0], [1], [0, 0, 1, 1], [], []>} : vector<4x72xf32>, vector<72x324xf32>, vector<4x324xf32> -> vector<4x324xf32>
    %c0_42 = arith.constant 0 : index
    %c0_43 = arith.constant 0 : index
    %159 = vector.load %arg6[%c0_42, %c0_43] : memref<4x1xf32, #tpu.memory_space<vmem>>, vector<4x1xf32>
    %160 = vector.broadcast %159 : vector<4x1xf32> to vector<4x324xf32>
    %161 = arith.addf %158, %160 : vector<4x324xf32>
    %cst_44 = arith.constant 0.000000e+00 : f32
    %162 = vector.broadcast %cst_44 : f32 to vector<4x324xf32>
    %163 = arith.maximumf %161, %162 : vector<4x324xf32>
    %c0_45 = arith.constant 0 : index
    %c0_46 = arith.constant 0 : index
    %164 = vector.load %arg4[%c0_45, %c0_46] : memref<1x324xf32, #tpu.memory_space<vmem>>, vector<1x324xf32>
    %165 = vector.broadcast %164 : vector<1x324xf32> to vector<4x324xf32>
    %166 = arith.mulf %163, %165 : vector<4x324xf32>
    %cst_47 = arith.constant 0.000000e+00 : f32
    %167 = vector.broadcast %cst_47 : f32 to vector<4x36xf32>
    %168 = tpu.concatenate %167, %166, %167 in 1 : vector<4x36xf32>, vector<4x324xf32>, vector<4x36xf32> -> vector<4x396xf32>
    %169 = vector.extract_strided_slice %168 {offsets = [0, 17], sizes = [4, 324], strides = [1, 1]} : vector<4x396xf32> to vector<4x324xf32>
    %170 = vector.extract_strided_slice %168 {offsets = [0, 18], sizes = [4, 324], strides = [1, 1]} : vector<4x396xf32> to vector<4x324xf32>
    %171 = vector.extract_strided_slice %168 {offsets = [0, 19], sizes = [4, 324], strides = [1, 1]} : vector<4x396xf32> to vector<4x324xf32>
    %172 = vector.extract_strided_slice %168 {offsets = [0, 35], sizes = [4, 324], strides = [1, 1]} : vector<4x396xf32> to vector<4x324xf32>
    %173 = vector.extract_strided_slice %168 {offsets = [0, 36], sizes = [4, 324], strides = [1, 1]} : vector<4x396xf32> to vector<4x324xf32>
    %174 = vector.extract_strided_slice %168 {offsets = [0, 37], sizes = [4, 324], strides = [1, 1]} : vector<4x396xf32> to vector<4x324xf32>
    %175 = vector.extract_strided_slice %168 {offsets = [0, 53], sizes = [4, 324], strides = [1, 1]} : vector<4x396xf32> to vector<4x324xf32>
    %176 = vector.extract_strided_slice %168 {offsets = [0, 54], sizes = [4, 324], strides = [1, 1]} : vector<4x396xf32> to vector<4x324xf32>
    %177 = vector.extract_strided_slice %168 {offsets = [0, 55], sizes = [4, 324], strides = [1, 1]} : vector<4x396xf32> to vector<4x324xf32>
    %178 = tpu.concatenate %169, %170, %171, %172, %173, %174, %175, %176, %177 in 0 : vector<4x324xf32>, vector<4x324xf32>, vector<4x324xf32>, vector<4x324xf32>, vector<4x324xf32>, vector<4x324xf32>, vector<4x324xf32>, vector<4x324xf32>, vector<4x324xf32> -> vector<36x324xf32>
    %c0_48 = arith.constant 0 : index
    %c0_49 = arith.constant 0 : index
    %179 = vector.load %arg7[%c0_48, %c0_49] : memref<4x36xf32, #tpu.memory_space<vmem>>, vector<4x36xf32>
    %cst_50 = arith.constant dense<0.000000e+00> : vector<4x324xf32>
    %180 = tpu.matmul %179, %178, %cst_50 {dimension_numbers = #tpu.dot_dimension_numbers<[1], [0], [0], [1], [0, 0, 1, 1], [], []>} : vector<4x36xf32>, vector<36x324xf32>, vector<4x324xf32> -> vector<4x324xf32>
    %c0_51 = arith.constant 0 : index
    %c0_52 = arith.constant 0 : index
    %181 = vector.load %arg8[%c0_51, %c0_52] : memref<4x1xf32, #tpu.memory_space<vmem>>, vector<4x1xf32>
    %182 = vector.broadcast %181 : vector<4x1xf32> to vector<4x324xf32>
    %183 = arith.addf %180, %182 : vector<4x324xf32>
    %cst_53 = arith.constant 0.000000e+00 : f32
    %184 = vector.broadcast %cst_53 : f32 to vector<4x324xf32>
    %185 = arith.maximumf %183, %184 : vector<4x324xf32>
    %c0_54 = arith.constant 0 : index
    %c0_55 = arith.constant 0 : index
    %c0_56 = arith.constant 0 : index
    %186 = vector.load %arg9[%c0_54, %c0_55, %c0_56] : memref<1x4x324xf32, #tpu.memory_space<vmem>>, vector<1x4x324xf32>
    %187 = vector.shape_cast %186 : vector<1x4x324xf32> to vector<4x324xf32>
    %188 = vector.shape_cast %185 : vector<4x324xf32> to vector<1x4x324xf32>
    tpu.vector_store %arg9[%c0_54, %c0_55, %c0_56], %188 {strides = array<i32>} : memref<1x4x324xf32, #tpu.memory_space<vmem>>, vector<1x4x324xf32>,
    return
  }
  func.func @transform_0(%arg0: i32) -> (i32, i32, i32) {
    %c0_i32 = arith.constant 0 : i32
    %c0_i32_0 = arith.constant 0 : i32
    %c0_i32_1 = arith.constant 0 : i32
    return %arg0, %c0_i32, %c0_i32_0 : i32, i32, i32
  }
  func.func @transform_1(%arg0: i32) -> (i32, i32, i32) {
    %c0_i32 = arith.constant 0 : i32
    %c0_i32_0 = arith.constant 0 : i32
    %c0_i32_1 = arith.constant 0 : i32
    return %arg0, %c0_i32, %c0_i32_0 : i32, i32, i32
  }
  func.func @transform_2(%arg0: i32) -> (i32, i32) {
    %c0_i32 = arith.constant 0 : i32
    %c0_i32_0 = arith.constant 0 : i32
    %c0_i32_1 = arith.constant 0 : i32
    return %c0_i32, %c0_i32_0 : i32, i32
  }
  func.func @transform_3(%arg0: i32) -> (i32, i32) {
    %c0_i32 = arith.constant 0 : i32
    %c0_i32_0 = arith.constant 0 : i32
    %c0_i32_1 = arith.constant 0 : i32
    return %c0_i32, %c0_i32_0 : i32, i32
  }
  func.func @transform_4(%arg0: i32) -> (i32, i32) {
    %c0_i32 = arith.constant 0 : i32
    %c0_i32_0 = arith.constant 0 : i32
    %c0_i32_1 = arith.constant 0 : i32
    return %c0_i32, %c0_i32_0 : i32, i32
  }
  func.func @transform_5(%arg0: i32) -> (i32, i32) {
    %c0_i32 = arith.constant 0 : i32
    %c0_i32_0 = arith.constant 0 : i32
    %c0_i32_1 = arith.constant 0 : i32
    return %c0_i32, %c0_i32_0 : i32, i32
  }
  func.func @transform_6(%arg0: i32) -> (i32, i32) {
    %c0_i32 = arith.constant 0 : i32
    %c0_i32_0 = arith.constant 0 : i32
    %c0_i32_1 = arith.constant 0 : i32
    return %c0_i32, %c0_i32_0 : i32, i32
  }
  func.func @transform_7(%arg0: i32) -> (i32, i32) {
    %c0_i32 = arith.constant 0 : i32
    %c0_i32_0 = arith.constant 0 : i32
    %c0_i32_1 = arith.constant 0 : i32
    return %c0_i32, %c0_i32_0 : i32, i32
  }
  func.func @transform_8(%arg0: i32) -> (i32, i32, i32) {
    %c0_i32 = arith.constant 0 : i32
    %c0_i32_0 = arith.constant 0 : i32
    %c0_i32_1 = arith.constant 0 : i32
    return %arg0, %c0_i32, %c0_i32_0 : i32, i32, i32
  }
}

</mosaic_0001>

<llo_original>
// kernel: tpu_custom_call.1
$region0: #{tpu_custom_call.1}
  #allocation0 [shape = 'u32[]', space=smem, size = 0x4, offset = 0x4, fixed_abs, tag = 'smem constant byte address 0x4 - core index']
  #allocation1 [shape = 'u32[144,128]{1,0:T(1,128)}', space=vmem, size = 0x12000, scoped, tag = 'internal scratch']
  %s0 = inlined_call_operand.vmem [shape: f32[2,32,8], index: 0, kind: input, shape index: {}]
  %s1 = inlined_call_operand.vmem [shape: f32[2,4,396], index: 1, kind: input, shape index: {}]
  %s2 = inlined_call_operand.vmem [shape: f32[8,18], index: 2, kind: input, shape index: {}]
  %s3 = inlined_call_operand.vmem [shape: f32[1,324], index: 3, kind: input, shape index: {}]
  %s4 = inlined_call_operand.vmem [shape: f32[4,72], index: 4, kind: input, shape index: {}]
  %s5 = inlined_call_operand.vmem [shape: f32[4,1], index: 5, kind: input, shape index: {}]
  %s6 = inlined_call_operand.vmem [shape: f32[4,36], index: 6, kind: input, shape index: {}]
  %s7 = inlined_call_operand.vmem [shape: f32[4,1], index: 7, kind: input, shape index: {}]
  %s8 = inlined_call_operand.hbm [shape: f32[2,4,324], index: 8, kind: output, shape index: {}]
  %s9 = sld [smem:[#allocation0]]
  $region65: #{tpu_custom_call.1} parent=0
    _
  %s11 = ssub.s32 1, %s9
  %s12 = scalar_select 0, %s11, %s9
  $region1: #{tpu_custom_call.1} parent=0
    #allocation2 [shape = 'u8[12288]{0}', space=vmem, size = 0x3000, scoped, tag = 'output window, operand 0']
    #allocation3 [shape = 's32[2]{0}', space=sflag, size = 0x8, scoped, tag = 'scoped memory for tpu_custom_call.1']
    %13 = vsyncpa [#allocation3], 0
    %s14 = scalar_lea.sflag [#allocation3], 1
    %15 = vsyncpa %s14, 0
    loop: start=0, step=1, limit=4
    $region2: #{tpu_custom_call.1} parent=1 // loop_pre_header
      _
    $region3: #{tpu_custom_call.1} parent=1 // loop_header
      %s17 = sphi 0, %s21
      %p18 = scmp.ge.s32.totalorder %s17, 4
      %s27 = sphi 0, %s29
      %s30 = sphi 0, %s27
      %s31 = sphi 0, %s30
      %s47 = sphi 0, %s31
      %s53 = sphi 0, %s55
      %s56 = sphi 0, %s53
      %s57 = sphi 0, %s56
      %s73 = sphi 0, %s57
      %s77 = sphi 0, %s77
      %s79 = sphi 0, %s77
      %s80 = sphi 0, %s79
      %s94 = sphi 0, %s80
      %s98 = sphi 0, %s98
      %s100 = sphi 0, %s98
      %s101 = sphi 0, %s100
      %s115 = sphi 0, %s101
      %s119 = sphi 0, %s119
      %s121 = sphi 0, %s119
      %s122 = sphi 0, %s121
      %s136 = sphi 0, %s122
      %s140 = sphi 0, %s140
      %s142 = sphi 0, %s140
      %s143 = sphi 0, %s142
      %s157 = sphi 0, %s143
      %s161 = sphi 0, %s161
      %s163 = sphi 0, %s161
      %s164 = sphi 0, %s163
      %s178 = sphi 0, %s164
      %s182 = sphi 0, %s182
      %s184 = sphi 0, %s182
      %s185 = sphi 0, %s184
      %s199 = sphi 0, %s185
      %s205 = sphi 0, %s207
      %s208 = sphi 0, %s205
      %s209 = sphi 0, %s208
      %s225 = sphi 0, %s209
    $region4: #{tpu_custom_call.1} parent=1 // loop_header_branch
      %20 = sbr.rel (%p18) target = $region8
    $region5: #{tpu_custom_call.1} parent=1 // loop_body
      %s22 = ssub.s32 %s17, 1
      %s23 = ssub.s32 %s17, 2
      %s24 = sadd.s32 %s17, 1
      %s25 = ssub.s32 %s17, %s24
      %p26 = scmp.eq.s32.totalorder %s25, 0
      %s28 = sadd.s32 %s27, 1
      %s29 = scalar_select %p26, %s27, %s28
      %p32 = pneg %p26
      %p33 = scmp.eq.s32.totalorder %s17, 1
      %p34 = por %p32, %p33
      %p35 = scmp.ne.s32.totalorder %s27, %s30
      %p36 = scmp.eq.s32.totalorder %s17, 0
      %p37 = por %p35, %p36
      %p38 = scmp.ne.s32.totalorder %s27, %s30
      %p39 = scmp.eq.s32.totalorder %s22, 1
      %p40 = por %p38, %p39
      %p41 = scmp.ne.s32.totalorder %s30, %s31
      %p42 = scmp.eq.s32.totalorder %s22, 0
      %p43 = por %p41, %p42
      %p44 = scmp.ne.s32.totalorder %s30, %s31
      %p45 = scmp.eq.s32.totalorder %s23, 1
      %p46 = por %p44, %p45
      %p48 = scmp.ne.s32.totalorder %s31, %s47
      %p49 = scmp.eq.s32.totalorder %s23, 0
      %p50 = por %p48, %p49
      %s51 = ssub.s32 %s17, %s24
      %p52 = scmp.eq.s32.totalorder %s51, 0
      %s54 = sadd.s32 %s53, 1
      %s55 = scalar_select %p52, %s53, %s54
      %p58 = pneg %p52
      %p59 = scmp.eq.s32.totalorder %s17, 1
      %p60 = por %p58, %p59
      %p61 = scmp.ne.s32.totalorder %s53, %s56
      %p62 = scmp.eq.s32.totalorder %s17, 0
      %p63 = por %p61, %p62
      %p64 = scmp.ne.s32.totalorder %s53, %s56
      %p65 = scmp.eq.s32.totalorder %s22, 1
      %p66 = por %p64, %p65
      %p67 = scmp.ne.s32.totalorder %s56, %s57
      %p68 = scmp.eq.s32.totalorder %s22, 0
      %p69 = por %p67, %p68
      %p70 = scmp.ne.s32.totalorder %s56, %s57
      %p71 = scmp.eq.s32.totalorder %s23, 1
      %p72 = por %p70, %p71
      %p74 = scmp.ne.s32.totalorder %s57, %s73
      %p75 = scmp.eq.s32.totalorder %s23, 0
      %p76 = por %p74, %p75
      %s78 = sadd.s32 %s77, 1
      %p81 = scmp.eq.s32.totalorder %s17, 1
      %p82 = scmp.ne.s32.totalorder %s77, %s79
      %p83 = scmp.eq.s32.totalorder %s17, 0
      %p84 = por %p82, %p83
      %p85 = scmp.ne.s32.totalorder %s77, %s79
      %p86 = scmp.eq.s32.totalorder %s22, 1
      %p87 = por %p85, %p86
      %p88 = scmp.ne.s32.totalorder %s79, %s80
      %p89 = scmp.eq.s32.totalorder %s22, 0
      %p90 = por %p88, %p89
      %p91 = scmp.ne.s32.totalorder %s79, %s80
      %p92 = scmp.eq.s32.totalorder %s23, 1
      %p93 = por %p91, %p92
      %p95 = scmp.ne.s32.totalorder %s80, %s94
      %p96 = scmp.eq.s32.totalorder %s23, 0
      %p97 = por %p95, %p96
      %s99 = sadd.s32 %s98, 1
      %p102 = scmp.eq.s32.totalorder %s17, 1
      %p103 = scmp.ne.s32.totalorder %s98, %s100
      %p104 = scmp.eq.s32.totalorder %s17, 0
      %p105 = por %p103, %p104
      %p106 = scmp.ne.s32.totalorder %s98, %s100
      %p107 = scmp.eq.s32.totalorder %s22, 1
      %p108 = por %p106, %p107
      %p109 = scmp.ne.s32.totalorder %s100, %s101
      %p110 = scmp.eq.s32.totalorder %s22, 0
      %p111 = por %p109, %p110
      %p112 = scmp.ne.s32.totalorder %s100, %s101
      %p113 = scmp.eq.s32.totalorder %s23, 1
      %p114 = por %p112, %p113
      %p116 = scmp.ne.s32.totalorder %s101, %s115
      %p117 = scmp.eq.s32.totalorder %s23, 0
      %p118 = por %p116, %p117
      %s120 = sadd.s32 %s119, 1
      %p123 = scmp.eq.s32.totalorder %s17, 1
      %p124 = scmp.ne.s32.totalorder %s119, %s121
      %p125 = scmp.eq.s32.totalorder %s17, 0
      %p126 = por %p124, %p125
      %p127 = scmp.ne.s32.totalorder %s119, %s121
      %p128 = scmp.eq.s32.totalorder %s22, 1
      %p129 = por %p127, %p128
      %p130 = scmp.ne.s32.totalorder %s121, %s122
      %p131 = scmp.eq.s32.totalorder %s22, 0
      %p132 = por %p130, %p131
      %p133 = scmp.ne.s32.totalorder %s121, %s122
      %p134 = scmp.eq.s32.totalorder %s23, 1
      %p135 = por %p133, %p134
      %p137 = scmp.ne.s32.totalorder %s122, %s136
      %p138 = scmp.eq.s32.totalorder %s23, 0
      %p139 = por %p137, %p138
      %s141 = sadd.s32 %s140, 1
      %p144 = scmp.eq.s32.totalorder %s17, 1
      %p145 = scmp.ne.s32.totalorder %s140, %s142
      %p146 = scmp.eq.s32.totalorder %s17, 0
      %p147 = por %p145, %p146
      %p148 = scmp.ne.s32.totalorder %s140, %s142
      %p149 = scmp.eq.s32.totalorder %s22, 1
      %p150 = por %p148, %p149
      %p151 = scmp.ne.s32.totalorder %s142, %s143
      %p152 = scmp.eq.s32.totalorder %s22, 0
      %p153 = por %p151, %p152
      %p154 = scmp.ne.s32.totalorder %s142, %s143
      %p155 = scmp.eq.s32.totalorder %s23, 1
      %p156 = por %p154, %p155
      %p158 = scmp.ne.s32.totalorder %s143, %s157
      %p159 = scmp.eq.s32.totalorder %s23, 0
      %p160 = por %p158, %p159
      %s162 = sadd.s32 %s161, 1
      %p165 = scmp.eq.s32.totalorder %s17, 1
      %p166 = scmp.ne.s32.totalorder %s161, %s163
      %p167 = scmp.eq.s32.totalorder %s17, 0
      %p168 = por %p166, %p167
      %p169 = scmp.ne.s32.totalorder %s161, %s163
      %p170 = scmp.eq.s32.totalorder %s22, 1
      %p171 = por %p169, %p170
      %p172 = scmp.ne.s32.totalorder %s163, %s164
      %p173 = scmp.eq.s32.totalorder %s22, 0
      %p174 = por %p172, %p173
      %p175 = scmp.ne.s32.totalorder %s163, %s164
      %p176 = scmp.eq.s32.totalorder %s23, 1
      %p177 = por %p175, %p176
      %p179 = scmp.ne.s32.totalorder %s164, %s178
      %p180 = scmp.eq.s32.totalorder %s23, 0
      %p181 = por %p179, %p180
      %s183 = sadd.s32 %s182, 1
      %p186 = scmp.eq.s32.totalorder %s17, 1
      %p187 = scmp.ne.s32.totalorder %s182, %s184
      %p188 = scmp.eq.s32.totalorder %s17, 0
      %p189 = por %p187, %p188
      %p190 = scmp.ne.s32.totalorder %s182, %s184
      %p191 = scmp.eq.s32.totalorder %s22, 1
      %p192 = por %p190, %p191
      %p193 = scmp.ne.s32.totalorder %s184, %s185
      %p194 = scmp.eq.s32.totalorder %s22, 0
      %p195 = por %p193, %p194
      %p196 = scmp.ne.s32.totalorder %s184, %s185
      %p197 = scmp.eq.s32.totalorder %s23, 1
      %p198 = por %p196, %p197
      %p200 = scmp.ne.s32.totalorder %s185, %s199
      %p201 = scmp.eq.s32.totalorder %s23, 0
      %p202 = por %p200, %p201
      %s203 = ssub.s32 %s17, %s24
      %p204 = scmp.eq.s32.totalorder %s203, 0
      %s206 = sadd.s32 %s205, 1
      %s207 = scalar_select %p204, %s205, %s206
      %p210 = pneg %p204
      %p211 = scmp.eq.s32.totalorder %s17, 1
      %p212 = por %p210, %p211
      %p213 = scmp.ne.s32.totalorder %s205, %s208
      %p214 = scmp.eq.s32.totalorder %s17, 0
      %p215 = por %p213, %p214
      %p216 = scmp.ne.s32.totalorder %s205, %s208
      %p217 = scmp.eq.s32.totalorder %s22, 1
      %p218 = por %p216, %p217
      %p219 = scmp.ne.s32.totalorder %s208, %s209
      %p220 = scmp.eq.s32.totalorder %s22, 0
      %p221 = por %p219, %p220
      %p222 = scmp.ne.s32.totalorder %s208, %s209
      %p223 = scmp.eq.s32.totalorder %s23, 1
      %p224 = por %p222, %p223
      %p226 = scmp.ne.s32.totalorder %s209, %s225
      %p227 = scmp.eq.s32.totalorder %s23, 0
      %p228 = por %p226, %p227
      %p229 = scmp.le.s32.totalorder 1, %s17
      %p230 = scmp.lt.s32.totalorder %s17, 3
      %p231 = pnand %p229, %p230
      %p232 = pneg %p231
      // Predicated region
      $region9: #{tpu_custom_call.1} parent=5 // pred_check
        _
      $region10: #{tpu_custom_call.1} parent=5 // pred_check_branch
        %234 = sbr.rel (%p231) target = $region12
      $region11: #{tpu_custom_call.1} parent=5 // pred_region
        %s235 = ssub.s32 %s17, 1
        // Predicated region
        $region13: #{tpu_custom_call.1} parent=11 // pred_check
          %p236 = pneg %p90
        $region14: #{tpu_custom_call.1} parent=11 // pred_check_branch
          %238 = sbr.rel (%p236) target = $region16
        $region15: #{tpu_custom_call.1} parent=11 // pred_region
          _
        $region16: #{tpu_custom_call.1} parent=11 // pred_fallthru
          _
        // Predicated region
        $region17: #{tpu_custom_call.1} parent=11 // pred_check
          %p239 = pneg %p111
        $region18: #{tpu_custom_call.1} parent=11 // pred_check_branch
          %241 = sbr.rel (%p239) target = $region20
        $region19: #{tpu_custom_call.1} parent=11 // pred_region
          _
        $region20: #{tpu_custom_call.1} parent=11 // pred_fallthru
          _
        // Predicated region
        $region21: #{tpu_custom_call.1} parent=11 // pred_check
          %p242 = pneg %p132
        $region22: #{tpu_custom_call.1} parent=11 // pred_check_branch
          %244 = sbr.rel (%p242) target = $region24
        $region23: #{tpu_custom_call.1} parent=11 // pred_region
          _
        $region24: #{tpu_custom_call.1} parent=11 // pred_fallthru
          _
        // Predicated region
        $region25: #{tpu_custom_call.1} parent=11 // pred_check
          %p245 = pneg %p153
        $region26: #{tpu_custom_call.1} parent=11 // pred_check_branch
          %247 = sbr.rel (%p245) target = $region28
        $region27: #{tpu_custom_call.1} parent=11 // pred_region
          _
        $region28: #{tpu_custom_call.1} parent=11 // pred_fallthru
          _
        // Predicated region
        $region29: #{tpu_custom_call.1} parent=11 // pred_check
          %p248 = pneg %p174
        $region30: #{tpu_custom_call.1} parent=11 // pred_check_branch
          %250 = sbr.rel (%p248) target = $region32
        $region31: #{tpu_custom_call.1} parent=11 // pred_region
          _
        $region32: #{tpu_custom_call.1} parent=11 // pred_fallthru
          _
        // Predicated region
        $region33: #{tpu_custom_call.1} parent=11 // pred_check
          %p251 = pneg %p195
        $region34: #{tpu_custom_call.1} parent=11 // pred_check_branch
          %253 = sbr.rel (%p251) target = $region36
        $region35: #{tpu_custom_call.1} parent=11 // pred_region
          _
        $region36: #{tpu_custom_call.1} parent=11 // pred_fallthru
          _
      $region12: #{tpu_custom_call.1} parent=5 // pred_fallthru
        _
      %p254 = scmp.lt.s32.totalorder %s17, 2
      // Predicated region
      $region37: #{tpu_custom_call.1} parent=5 // pred_check
        %p255 = pneg %p254
      $region38: #{tpu_custom_call.1} parent=5 // pred_check_branch
        %257 = sbr.rel (%p255) target = $region40
      $region39: #{tpu_custom_call.1} parent=5 // pred_region
        // Predicated region
        $region41: #{tpu_custom_call.1} parent=39 // pred_check
          %p258 = pneg %p37
        $region42: #{tpu_custom_call.1} parent=39 // pred_check_branch
          %260 = sbr.rel (%p258) target = $region44
        $region43: #{tpu_custom_call.1} parent=39 // pred_region
          %p261 = scmp.lt.s32.totalorder %s17, 1
          %s262 = scalar_select %p261, %s17, 1
          %s263 = smul.addr %s262, 4
          %s264 = smul.addr %s263, 8
          %s265 = scalar_lea.vmem %s0, %s264
        $region44: #{tpu_custom_call.1} parent=39 // pred_fallthru
          _
        // Predicated region
        $region45: #{tpu_custom_call.1} parent=39 // pred_check
          %p266 = pneg %p63
        $region46: #{tpu_custom_call.1} parent=39 // pred_check_branch
          %268 = sbr.rel (%p266) target = $region48
        $region47: #{tpu_custom_call.1} parent=39 // pred_region
          %p269 = scmp.lt.s32.totalorder %s17, 1
          %s270 = scalar_select %p269, %s17, 1
          %s271 = smul.addr %s270, 4
          %s272 = smul.addr %s271, 4
          %s273 = scalar_lea.vmem %s1, %s272
        $region48: #{tpu_custom_call.1} parent=39 // pred_fallthru
          _
      $region40: #{tpu_custom_call.1} parent=5 // pred_fallthru
        _
      %p274 = scmp.le.s32.totalorder 1, %s17
      %p275 = scmp.lt.s32.totalorder %s17, 3
      %p276 = pnand %p274, %p275
      %p277 = pneg %p276
      // Predicated region
      $region49: #{tpu_custom_call.1} parent=5 // pred_check
        _
      $region50: #{tpu_custom_call.1} parent=5 // pred_check_branch
        %279 = sbr.rel (%p276) target = $region52
      $region51: #{tpu_custom_call.1} parent=5 // pred_region
        %s280 = ssub.s32 %s17, 1
        %p281 = scmp.lt.s32.totalorder %s22, 1
        %s282 = scalar_select %p281, %s22, 1
        %s283 = smul.addr %s282, 4
        %s284 = smul.addr %s283, 8
        %s285 = scalar_lea.vmem %s0, %s284
        %p286 = pneg %p43
        %p287 = pneg %p40
        %p288 = scmp.lt.s32.totalorder %s22, 1
        %s289 = scalar_select %p288, %s22, 1
        %s290 = smul.addr %s289, 4
        %s291 = smul.addr %s290, 4
        %s292 = scalar_lea.vmem %s1, %s291
        %p293 = pneg %p69
        %p294 = pneg %p66
        %p295 = pneg %p90
        %p296 = pneg %p87
        %p297 = pneg %p111
        %p298 = pneg %p108
        %p299 = pneg %p132
        %p300 = pneg %p129
        %p301 = pneg %p153
        %p302 = pneg %p150
        %p303 = pneg %p174
        %p304 = pneg %p171
        %p305 = pneg %p195
        %p306 = pneg %p192
        %p307 = pneg %p221
        %p308 = pneg %p218
        %s309 = sand.u32 %s208, 1
        %s310 = scalar_lea.sflag [#allocation3], %s309
        %s311 = sand.u32 %s208, 1
        %s312 = smul.addr %s311, 12
        %s313 = scalar_lea.vmem [#allocation2], %s312
        %p314 = scmp.lt.s32.totalorder %s22, 1
        %s315 = scalar_select %p314, %s22, 1
        %s316 = smul.addr %s315, 4
        %s317 = smul.addr %s316, 8
        %s318 = scalar_lea.vmem %s0, %s317
        %p319 = scmp.lt.s32.totalorder %s22, 1
        %s320 = scalar_select %p319, %s22, 1
        %s321 = smul.addr %s320, 4
        %s322 = smul.addr %s321, 4
        %s323 = scalar_lea.vmem %s1, %s322
        %v324 = vld [vmem:[%s318] sm:$0xff]
        %v325 = vld [vmem:[%s318 + $0x8] sm:$0xff]
        %v326 = vld [vmem:[%s318 + $0x10] sm:$0xff]
        %v327 = vld [vmem:[%s318 + $0x18] sm:$0xff]
        %v328 = vld [vmem:[%s2] sm:$0xff]
        %vm329 = vcmask 64512
        %v331 = vsel %vm329, %v324, 0
        %v334 = vsel %vm329, %v325, 0
        %v337 = vsel %vm329, %v326, 0
        %v340 = vsel %vm329, %v327, 0
        %342 = vmatprep.subr.mxu0 0.0
        %343 = vmatpush1.msra.mxu0 %v328
        %344 = vmatprep.subr.mxu0 0.0
        %345 = vmatpush1.msra.mxu0 0.0
        %346 = vmatprep.subr.mxu0 0.0
        %347 = vmatpush1.msra.mxu0 0.0
        %348 = vmatprep.subr.mxu0 0.0
        %349 = vmatpush1.msra.mxu0 0.0
        %350 = vmatprep.subr.mxu0 0.0
        %351 = vmatpush1.msra.mxu0 0.0
        %352 = vmatprep.subr.mxu0 0.0
        %353 = vmatpush1.msra.mxu0 0.0
        %354 = vmatprep.subr.mxu0 0.0
        %355 = vmatpush1.msra.mxu0 0.0
        %356 = vmatprep.subr.mxu0 0.0
        %357 = vmatpush1.msra.mxu0 0.0
        %358 = vmatprep.subr.mxu0 0.0
        %359 = vmatpush1.msra.mxu0 0.0
        %360 = vmatprep.subr.mxu0 0.0
        %361 = vmatpush1.msra.mxu0 0.0
        %362 = vmatprep.subr.mxu0 0.0
        %363 = vmatpush1.msra.mxu0 0.0
        %364 = vmatprep.subr.mxu0 0.0
        %365 = vmatpush1.msra.mxu0 0.0
        %366 = vmatprep.subr.mxu0 0.0
        %367 = vmatpush1.msra.mxu0 0.0
        %368 = vmatprep.subr.mxu0 0.0
        %369 = vmatpush1.msra.mxu0 0.0
        %370 = vmatprep.subr.mxu0 0.0
        %371 = vmatpush1.msra.mxu0 0.0
        %372 = vmatprep.subr.mxu0 0.0
        %373 = vmatpush1.msra.mxu0 0.0
        %374 = vmatprep.subr.mxu0 0.0
        %375 = vmatpush1.msra.mxu0 0.0
        %376 = vmatprep.subr.mxu0 0.0
        %377 = vmatpush1.msra.mxu0 0.0
        %378 = vmatprep.subr.mxu0 0.0
        %379 = vmatpush1.msra.mxu0 0.0
        %380 = vmatprep.subr.mxu0 0.0
        %381 = vmatpush1.msra.mxu0 0.0
        %382 = vmatprep.subr.mxu0 0.0
        %383 = vmatpush1.msra.mxu0 0.0
        %384 = vmatprep.subr.mxu0 0.0
        %385 = vmatpush1.msra.mxu0 0.0
        %386 = vmatprep.subr.mxu0 0.0
        %387 = vmatpush1.msra.mxu0 0.0
        %388 = vmatprep.subr.mxu0 0.0
        %389 = vmatpush1.msra.mxu0 0.0
        %390 = vmatprep.subr.mxu0 0.0
        %391 = vmatpush1.msra.mxu0 0.0
        %392 = vmatprep.subr.mxu0 0.0
        %393 = vmatpush1.msra.mxu0 0.0
        %394 = vmatprep.subr.mxu0 0.0
        %395 = vmatpush1.msra.mxu0 0.0
        %396 = vmatprep.subr.mxu0 0.0
        %397 = vmatpush1.msra.mxu0 0.0
        %398 = vmatprep.subr.mxu0 0.0
        %399 = vmatpush1.msra.mxu0 0.0
        %400 = vmatprep.subr.mxu0 0.0
        %401 = vmatpush1.msra.mxu0 0.0
        %402 = vmatprep.subr.mxu0 0.0
        %403 = vmatpush1.msra.mxu0 0.0
        %404 = vmatprep.subr.mxu0 0.0
        %405 = vmatpush1.msra.mxu0 0.0
        %406 = vmatprep.mubr.f32.mxu0 0.0
        %407 = vmatmul.mubr.f32.gmra.mrb[0].mxu0 %v331
        %v408 = vpop.f32.mrb[0].mxu0
        %v409 = vadd.f32 0.0, %v408
        %v410 = vpop.f32.mrb[0].mxu0
        %411 = vmatprep.mubr.f32.mxu0 0.0
        %412 = vmatmul.mubr.f32.gmra.mrb[0].mxu0 %v334
        %v413 = vpop.f32.mrb[0].mxu0
        %v414 = vadd.f32 0.0, %v413
        %v415 = vpop.f32.mrb[0].mxu0
        %416 = vmatprep.mubr.f32.mxu0 0.0
        %417 = vmatmul.mubr.f32.gmra.mrb[0].mxu0 %v337
        %v418 = vpop.f32.mrb[0].mxu0
        %v419 = vadd.f32 0.0, %v418
        %v420 = vpop.f32.mrb[0].mxu0
        %421 = vmatprep.mubr.f32.mxu0 0.0
        %422 = vmatmul.mubr.f32.gmra.mrb[0].mxu0 %v340
        %v423 = vpop.f32.mrb[0].mxu0
        %v424 = vadd.f32 0.0, %v423
        %v425 = vpop.f32.mrb[0].mxu0
        %426 = vdwg.mxu0
        %v427 = vmul.f32 %v409, 0.5333333
        %v428 = vmul.f32 %v414, 0.5333333
        %v429 = vmul.f32 %v419, 0.5333333
        %v430 = vmul.f32 %v424, 0.5333333
        %v431 = vmul.f32 %v409, 0.46666667
        %v432 = vmul.f32 %v414, 0.46666667
        %v433 = vmul.f32 %v419, 0.46666667
        %v434 = vmul.f32 %v424, 0.46666667
        %v439 = vrot.slane %v431, 1
        %v440 = vrot.slane %v432, 1
        %v441 = vrot.slane %v433, 1
        %v442 = vrot.slane %v434, 1
        %v447 = vadd.f32 %v427, %v439
        %v448 = vadd.f32 %v428, %v440
        %v449 = vadd.f32 %v429, %v441
        %v450 = vadd.f32 %v430, %v442
        %v451 = vmul.f32 %v409, 0.06666666
        %v452 = vmul.f32 %v414, 0.06666666
        %v453 = vmul.f32 %v419, 0.06666666
        %v454 = vmul.f32 %v424, 0.06666666
        %v455 = vmul.f32 %v409, 0.93333334
        %v456 = vmul.f32 %v414, 0.93333334
        %v457 = vmul.f32 %v419, 0.93333334
        %v458 = vmul.f32 %v424, 0.93333334
        %v463 = vrot.slane %v455, 1
        %v464 = vrot.slane %v456, 1
        %v465 = vrot.slane %v457, 1
        %v466 = vrot.slane %v458, 1
        %v471 = vadd.f32 %v451, %v463
        %v472 = vadd.f32 %v452, %v464
        %v473 = vadd.f32 %v453, %v465
        %v474 = vadd.f32 %v454, %v466
        %v475 = vmul.f32 %v409, 0.6
        %v476 = vmul.f32 %v414, 0.6
        %v477 = vmul.f32 %v419, 0.6
        %v478 = vmul.f32 %v424, 0.6
        %v479 = vmul.f32 %v409, 0.4
        %v480 = vmul.f32 %v414, 0.4
        %v481 = vmul.f32 %v419, 0.4
        %v482 = vmul.f32 %v424, 0.4
        %v487 = vrot.slane %v479, 1
        %v488 = vrot.slane %v480, 1
        %v489 = vrot.slane %v481, 1
        %v490 = vrot.slane %v482, 1
        %v495 = vadd.f32 %v475, %v487
        %v496 = vadd.f32 %v476, %v488
        %v497 = vadd.f32 %v477, %v489
        %v498 = vadd.f32 %v478, %v490
        %v499 = vmul.f32 %v409, 0.13333333
        %v500 = vmul.f32 %v414, 0.13333333
        %v501 = vmul.f32 %v419, 0.13333333
        %v502 = vmul.f32 %v424, 0.13333333
        %v503 = vmul.f32 %v409, 0.8666667
        %v504 = vmul.f32 %v414, 0.8666667
        %v505 = vmul.f32 %v419, 0.8666667
        %v506 = vmul.f32 %v424, 0.8666667
        %v511 = vrot.slane %v503, 1
        %v512 = vrot.slane %v504, 1
        %v513 = vrot.slane %v505, 1
        %v514 = vrot.slane %v506, 1
        %v519 = vadd.f32 %v499, %v511
        %v520 = vadd.f32 %v500, %v512
        %v521 = vadd.f32 %v501, %v513
        %v522 = vadd.f32 %v502, %v514
        %v523 = vmul.f32 %v409, 0.6666666
        %v524 = vmul.f32 %v414, 0.6666666
        %v525 = vmul.f32 %v419, 0.6666666
        %v526 = vmul.f32 %v424, 0.6666666
        %v527 = vmul.f32 %v409, 0.33333334
        %v528 = vmul.f32 %v414, 0.33333334
        %v529 = vmul.f32 %v419, 0.33333334
        %v530 = vmul.f32 %v424, 0.33333334
        %v535 = vrot.slane %v527, 1
        %v536 = vrot.slane %v528, 1
        %v537 = vrot.slane %v529, 1
        %v538 = vrot.slane %v530, 1
        %v543 = vadd.f32 %v523, %v535
        %v544 = vadd.f32 %v524, %v536
        %v545 = vadd.f32 %v525, %v537
        %v546 = vadd.f32 %v526, %v538
        %v547 = vmul.f32 %v409, 0.19999999
        %v548 = vmul.f32 %v414, 0.19999999
        %v549 = vmul.f32 %v419, 0.19999999
        %v550 = vmul.f32 %v424, 0.19999999
        %v551 = vmul.f32 %v409, 0.8
        %v552 = vmul.f32 %v414, 0.8
        %v553 = vmul.f32 %v419, 0.8
        %v554 = vmul.f32 %v424, 0.8
        %v559 = vrot.slane %v551, 1
        %v560 = vrot.slane %v552, 1
        %v561 = vrot.slane %v553, 1
        %v562 = vrot.slane %v554, 1
        %v567 = vadd.f32 %v547, %v559
        %v568 = vadd.f32 %v548, %v560
        %v569 = vadd.f32 %v549, %v561
        %v570 = vadd.f32 %v550, %v562
        %v571 = vmul.f32 %v409, 0.73333335
        %v572 = vmul.f32 %v414, 0.73333335
        %v573 = vmul.f32 %v419, 0.73333335
        %v574 = vmul.f32 %v424, 0.73333335
        %v575 = vmul.f32 %v409, 0.26666668
        %v576 = vmul.f32 %v414, 0.26666668
        %v577 = vmul.f32 %v419, 0.26666668
        %v578 = vmul.f32 %v424, 0.26666668
        %v583 = vrot.slane %v575, 1
        %v584 = vrot.slane %v576, 1
        %v585 = vrot.slane %v577, 1
        %v586 = vrot.slane %v578, 1
        %v591 = vadd.f32 %v571, %v583
        %v592 = vadd.f32 %v572, %v584
        %v593 = vadd.f32 %v573, %v585
        %v594 = vadd.f32 %v574, %v586
        %v595 = vmul.f32 %v409, 0.26666665
        %v596 = vmul.f32 %v414, 0.26666665
        %v597 = vmul.f32 %v419, 0.26666665
        %v598 = vmul.f32 %v424, 0.26666665
        %v603 = vrot.slane %v571, 1
        %v604 = vrot.slane %v572, 1
        %v605 = vrot.slane %v573, 1
        %v606 = vrot.slane %v574, 1
        %v611 = vadd.f32 %v595, %v603
        %v612 = vadd.f32 %v596, %v604
        %v613 = vadd.f32 %v597, %v605
        %v614 = vadd.f32 %v598, %v606
        %v615 = vmul.f32 %v409, 0.2
        %v616 = vmul.f32 %v414, 0.2
        %v617 = vmul.f32 %v419, 0.2
        %v618 = vmul.f32 %v424, 0.2
        %v623 = vrot.slane %v615, 1
        %v624 = vrot.slane %v616, 1
        %v625 = vrot.slane %v617, 1
        %v626 = vrot.slane %v618, 1
        %v631 = vadd.f32 %v551, %v623
        %v632 = vadd.f32 %v552, %v624
        %v633 = vadd.f32 %v553, %v625
        %v634 = vadd.f32 %v554, %v626
        %v635 = vmul.f32 %v409, 0.3333333
        %v636 = vmul.f32 %v414, 0.3333333
        %v637 = vmul.f32 %v419, 0.3333333
        %v638 = vmul.f32 %v424, 0.3333333
        %v639 = vmul.f32 %v409, 0.6666667
        %v640 = vmul.f32 %v414, 0.6666667
        %v641 = vmul.f32 %v419, 0.6666667
        %v642 = vmul.f32 %v424, 0.6666667
        %v647 = vrot.slane %v639, 1
        %v648 = vrot.slane %v640, 1
        %v649 = vrot.slane %v641, 1
        %v650 = vrot.slane %v642, 1
        %v655 = vadd.f32 %v635, %v647
        %v656 = vadd.f32 %v636, %v648
        %v657 = vadd.f32 %v637, %v649
        %v658 = vadd.f32 %v638, %v650
        %v659 = vmul.f32 %v409, 0.13333334
        %v660 = vmul.f32 %v414, 0.13333334
        %v661 = vmul.f32 %v419, 0.13333334
        %v662 = vmul.f32 %v424, 0.13333334
        %v667 = vrot.slane %v659, 1
        %v668 = vrot.slane %v660, 1
        %v669 = vrot.slane %v661, 1
        %v670 = vrot.slane %v662, 1
        %v675 = vadd.f32 %v503, %v667
        %v676 = vadd.f32 %v504, %v668
        %v677 = vadd.f32 %v505, %v669
        %v678 = vadd.f32 %v506, %v670
        %v679 = vmul.f32 %v409, 0.39999998
        %v680 = vmul.f32 %v414, 0.39999998
        %v681 = vmul.f32 %v419, 0.39999998
        %v682 = vmul.f32 %v424, 0.39999998
        %v687 = vrot.slane %v475, 1
        %v688 = vrot.slane %v476, 1
        %v689 = vrot.slane %v477, 1
        %v690 = vrot.slane %v478, 1
        %v695 = vadd.f32 %v679, %v687
        %v696 = vadd.f32 %v680, %v688
        %v697 = vadd.f32 %v681, %v689
        %v698 = vadd.f32 %v682, %v690
        %v699 = vmul.f32 %v409, 0.06666667
        %v700 = vmul.f32 %v414, 0.06666667
        %v701 = vmul.f32 %v419, 0.06666667
        %v702 = vmul.f32 %v424, 0.06666667
        %v707 = vrot.slane %v699, 1
        %v708 = vrot.slane %v700, 1
        %v709 = vrot.slane %v701, 1
        %v710 = vrot.slane %v702, 1
        %v715 = vadd.f32 %v455, %v707
        %v716 = vadd.f32 %v456, %v708
        %v717 = vadd.f32 %v457, %v709
        %v718 = vadd.f32 %v458, %v710
        %v719 = vmul.f32 %v409, 0.46666664
        %v720 = vmul.f32 %v414, 0.46666664
        %v721 = vmul.f32 %v419, 0.46666664
        %v722 = vmul.f32 %v424, 0.46666664
        %v723 = vmul.f32 %v409, 0.53333336
        %v724 = vmul.f32 %v414, 0.53333336
        %v725 = vmul.f32 %v419, 0.53333336
        %v726 = vmul.f32 %v424, 0.53333336
        %v731 = vrot.slane %v723, 1
        %v732 = vrot.slane %v724, 1
        %v733 = vrot.slane %v725, 1
        %v734 = vrot.slane %v726, 1
        %v739 = vadd.f32 %v719, %v731
        %v740 = vadd.f32 %v720, %v732
        %v741 = vadd.f32 %v721, %v733
        %v742 = vadd.f32 %v722, %v734
        %v747 = vrot.slane %v414, 7
        %vm748 = vcmask 1041409
        %v749 = vsel %vm748, %v747, %v409
        %v750 = vrot.slane %v419, 6
        %vm751 = vcmask 1042434
        %v752 = vsel %vm751, %v750, %v749
        %v753 = vrot.slane %v424, 5
        %vm754 = vcmask 1043459
        %v755 = vsel %vm754, %v753, %v752
        %756 = vrot.lane.b32.xlu0 %v755, 54
        %v757 = vpop.permute.xlu0 %756
        %v763 = vrot.slane %v448, 7
        %v764 = vsel %vm748, %v763, %v447
        %v765 = vrot.slane %v449, 6
        %v766 = vsel %vm751, %v765, %v764
        %v767 = vrot.slane %v450, 5
        %v768 = vsel %vm754, %v767, %v766
        %769 = vrot.lane.b32.xlu0 %v768, 72
        %v770 = vpop.permute.xlu0 %769
        %v776 = vrot.slane %v472, 7
        %v777 = vsel %vm748, %v776, %v471
        %v778 = vrot.slane %v473, 6
        %v779 = vsel %vm751, %v778, %v777
        %v780 = vrot.slane %v474, 5
        %v781 = vsel %vm754, %v780, %v779
        %782 = vrot.lane.b32.xlu0 %v781, 90
        %v783 = vpop.permute.xlu0 %782
        %v789 = vrot.slane %v495, 1
        %v790 = vsel %vm748, %v496, %v789
        %v791 = vrot.slane %v497, 7
        %v792 = vsel %vm751, %v791, %v790
        %v793 = vrot.slane %v498, 6
        %v794 = vsel %vm754, %v793, %v792
        %795 = vrot.lane.b32.xlu0 %v794, 108
        %v796 = vpop.permute.xlu0 %795
        %v802 = vrot.slane %v519, 1
        %v803 = vsel %vm748, %v520, %v802
        %v804 = vrot.slane %v521, 7
        %v805 = vsel %vm751, %v804, %v803
        %v806 = vrot.slane %v522, 6
        %v807 = vsel %vm754, %v806, %v805
        %808 = vrot.lane.b32.xlu0 %v807, 126
        %v809 = vpop.permute.xlu0 %808
        %v815 = vrot.slane %v543, 2
        %v816 = vrot.slane %v544, 1
        %v817 = vsel %vm748, %v816, %v815
        %v818 = vsel %vm751, %v545, %v817
        %v819 = vrot.slane %v546, 7
        %v820 = vsel %vm754, %v819, %v818
        %821 = vrot.lane.b32.xlu0 %v820, 16
        %v822 = vpop.permute.xlu0 %821
        %v828 = vrot.slane %v567, 2
        %v829 = vrot.slane %v568, 1
        %v830 = vsel %vm748, %v829, %v828
        %v831 = vsel %vm751, %v569, %v830
        %v832 = vrot.slane %v570, 7
        %v833 = vsel %vm754, %v832, %v831
        %834 = vrot.lane.b32.xlu0 %v833, 34
        %v835 = vpop.permute.xlu0 %834
        %v841 = vrot.slane %v591, 3
        %v842 = vrot.slane %v592, 2
        %v843 = vsel %vm748, %v842, %v841
        %v844 = vrot.slane %v593, 1
        %v845 = vsel %vm751, %v844, %v843
        %v846 = vsel %vm754, %v594, %v845
        %847 = vrot.lane.b32.xlu0 %v846, 52
        %v848 = vpop.permute.xlu0 %847
        %v854 = vrot.slane %v611, 3
        %v855 = vrot.slane %v612, 2
        %v856 = vsel %vm748, %v855, %v854
        %v857 = vrot.slane %v613, 1
        %v858 = vsel %vm751, %v857, %v856
        %v859 = vsel %vm754, %v614, %v858
        %860 = vrot.lane.b32.xlu0 %v859, 70
        %v861 = vpop.permute.xlu0 %860
        %v867 = vrot.slane %v631, 4
        %v868 = vrot.slane %v632, 3
        %v869 = vsel %vm748, %v868, %v867
        %v870 = vrot.slane %v633, 2
        %v871 = vsel %vm751, %v870, %v869
        %v872 = vrot.slane %v634, 1
        %v873 = vsel %vm754, %v872, %v871
        %874 = vrot.lane.b32.xlu0 %v873, 88
        %v875 = vpop.permute.xlu0 %874
        %v881 = vrot.slane %v655, 4
        %v882 = vrot.slane %v656, 3
        %v883 = vsel %vm748, %v882, %v881
        %v884 = vrot.slane %v657, 2
        %v885 = vsel %vm751, %v884, %v883
        %v886 = vrot.slane %v658, 1
        %v887 = vsel %vm754, %v886, %v885
        %888 = vrot.lane.b32.xlu0 %v887, 106
        %v889 = vpop.permute.xlu0 %888
        %v895 = vrot.slane %v675, 5
        %v896 = vrot.slane %v676, 4
        %v897 = vsel %vm748, %v896, %v895
        %v898 = vrot.slane %v677, 3
        %v899 = vsel %vm751, %v898, %v897
        %v900 = vrot.slane %v678, 2
        %v901 = vsel %vm754, %v900, %v899
        %902 = vrot.lane.b32.xlu0 %v901, 124
        %v903 = vpop.permute.xlu0 %902
        %v909 = vrot.slane %v695, 5
        %v910 = vrot.slane %v696, 4
        %v911 = vsel %vm748, %v910, %v909
        %v912 = vrot.slane %v697, 3
        %v913 = vsel %vm751, %v912, %v911
        %v914 = vrot.slane %v698, 2
        %v915 = vsel %vm754, %v914, %v913
        %916 = vrot.lane.b32.xlu0 %v915, 14
        %v917 = vpop.permute.xlu0 %916
        %v923 = vrot.slane %v715, 6
        %v924 = vrot.slane %v716, 5
        %v925 = vsel %vm748, %v924, %v923
        %v926 = vrot.slane %v717, 4
        %v927 = vsel %vm751, %v926, %v925
        %v928 = vrot.slane %v718, 3
        %v929 = vsel %vm754, %v928, %v927
        %930 = vrot.lane.b32.xlu0 %v929, 32
        %v931 = vpop.permute.xlu0 %930
        %v937 = vrot.slane %v739, 6
        %v938 = vrot.slane %v740, 5
        %v939 = vsel %vm748, %v938, %v937
        %v940 = vrot.slane %v741, 4
        %v941 = vsel %vm751, %v940, %v939
        %v942 = vrot.slane %v742, 3
        %v943 = vsel %vm754, %v942, %v941
        %944 = vrot.lane.b32.xlu0 %v943, 50
        %v945 = vpop.permute.xlu0 %944
        %vm947 = vcmask 441344
        %v948 = vsel %vm947, 0.0, %v757
        %vm949 = vcmask 588800
        %v950 = vsel %vm949, %v948, %v770
        %vm951 = vcmask 736256
        %v952 = vsel %vm951, %v950, %v783
        %vm953 = vcmask 883712
        %v954 = vsel %vm953, %v952, %v796
        %vm955 = vcmask 1031168
        %v956 = vsel %vm955, %v954, %v809
        %vm957 = vcmask 130048
        %v958 = vsel %vm957, %v809, %v822
        %vm959 = vcmask 277504
        %v960 = vsel %vm959, %v958, %v835
        %vm961 = vcmask 424960
        %v962 = vsel %vm961, %v960, %v848
        %vm963 = vcmask 572416
        %v964 = vsel %vm963, %v962, %v861
        %vm965 = vcmask 719872
        %v966 = vsel %vm965, %v964, %v875
        %vm967 = vcmask 867328
        %v968 = vsel %vm967, %v966, %v889
        %vm969 = vcmask 1014784
        %v970 = vsel %vm969, %v968, %v903
        %vm971 = vcmask 113664
        %v972 = vsel %vm971, %v903, %v917
        %vm973 = vcmask 261120
        %v974 = vsel %vm973, %v972, %v931
        %vm975 = vcmask 408576
        %v976 = vsel %vm975, %v974, %v945
        %v977 = vsel %vm748, %v750, %v747
        %v978 = vsel %vm751, %v753, %v977
        %vm981 = vcmask 146432
        %v982 = vsel %vm981, %v409, 0.0
        %v983 = vsel %vm981, %v978, 0.0
        %vm986 = vcmask 1040384
        %v987 = vrot.slane %v982, 7
        %v988 = vrot.slane %v983, 7
        %v989 = vsel %vm986, %v987, %v988
        %990 = vrot.lane.b32.xlu0 %v989, 68
        %v991 = vpop.permute.xlu0 %990
        %vm993 = vcmask 556032
        %v994 = vsel %vm993, %v976, %v991
        %v995 = vld [vmem:[%s323] sm:$0xff]
        %v996 = vld [vmem:[%s323 + $0x8] sm:$0xff]
        %v998 = vcombine.high %v995, %v995
        %v1003 = vrot.slane %v956, 4
        %v1004 = vrot.slane %v970, 4
        %v1005 = vrot.slane %v994, 4
        %vm1009 = vcmask 1043456
        %v1010 = vsel %vm1009, %v995, %v1003
        %v1011 = vsel %vm1009, %v998, %v1004
        %v1012 = vsel %vm1009, %v996, %v1005
        %1016 = vrot.lane.b32.xlu0 %v1010, 127
        %v1017 = vpop.permute.xlu0 %1016
        %1018 = vrot.lane.b32.xlu0 %v1011, 127
        %v1019 = vpop.permute.xlu0 %1018
        %1020 = vrot.lane.b32.xlu0 %v1012, 127
        %v1021 = vpop.permute.xlu0 %1020
        %vm1022 = vcmask 1039360
        %v1023 = vsel %vm1022, %v1017, %v1019
        %v1024 = vsel %vm1022, %v1019, %v1021
        %1025 = vrot.lane.b32.xlu0 %v1010, 126
        %v1026 = vpop.permute.xlu0 %1025
        %1027 = vrot.lane.b32.xlu0 %v1011, 126
        %v1028 = vpop.permute.xlu0 %1027
        %1029 = vrot.lane.b32.xlu0 %v1012, 126
        %v1030 = vpop.permute.xlu0 %1029
        %v1031 = vsel %vm955, %v1026, %v1028
        %v1032 = vsel %vm955, %v1028, %v1030
        %1033 = vrot.lane.b32.xlu0 %v1010, 110
        %v1034 = vpop.permute.xlu0 %1033
        %1035 = vrot.lane.b32.xlu0 %v1011, 110
        %v1036 = vpop.permute.xlu0 %1035
        %1037 = vrot.lane.b32.xlu0 %v1012, 110
        %v1038 = vpop.permute.xlu0 %1037
        %vm1039 = vcmask 900096
        %v1040 = vsel %vm1039, %v1034, %v1036
        %v1041 = vsel %vm1039, %v1036, %v1038
        %1042 = vrot.lane.b32.xlu0 %v1010, 109
        %v1043 = vpop.permute.xlu0 %1042
        %1044 = vrot.lane.b32.xlu0 %v1011, 109
        %v1045 = vpop.permute.xlu0 %1044
        %1046 = vrot.lane.b32.xlu0 %v1012, 109
        %v1047 = vpop.permute.xlu0 %1046
        %vm1048 = vcmask 891904
        %v1049 = vsel %vm1048, %v1043, %v1045
        %v1050 = vsel %vm1048, %v1045, %v1047
        %1051 = vrot.lane.b32.xlu0 %v1010, 108
        %v1052 = vpop.permute.xlu0 %1051
        %1053 = vrot.lane.b32.xlu0 %v1011, 108
        %v1054 = vpop.permute.xlu0 %1053
        %1055 = vrot.lane.b32.xlu0 %v1012, 108
        %v1056 = vpop.permute.xlu0 %1055
        %v1057 = vsel %vm953, %v1052, %v1054
        %v1058 = vsel %vm953, %v1054, %v1056
        %1059 = vrot.lane.b32.xlu0 %v1010, 92
        %v1060 = vpop.permute.xlu0 %1059
        %1061 = vrot.lane.b32.xlu0 %v1011, 92
        %v1062 = vpop.permute.xlu0 %1061
        %1063 = vrot.lane.b32.xlu0 %v1012, 92
        %v1064 = vpop.permute.xlu0 %1063
        %vm1065 = vcmask 752640
        %v1066 = vsel %vm1065, %v1060, %v1062
        %v1067 = vsel %vm1065, %v1062, %v1064
        %1068 = vrot.lane.b32.xlu0 %v1010, 91
        %v1069 = vpop.permute.xlu0 %1068
        %1070 = vrot.lane.b32.xlu0 %v1011, 91
        %v1071 = vpop.permute.xlu0 %1070
        %1072 = vrot.lane.b32.xlu0 %v1012, 91
        %v1073 = vpop.permute.xlu0 %1072
        %vm1074 = vcmask 744448
        %v1075 = vsel %vm1074, %v1069, %v1071
        %v1076 = vsel %vm1074, %v1071, %v1073
        %1077 = vrot.lane.b32.xlu0 %v1010, 90
        %v1078 = vpop.permute.xlu0 %1077
        %1079 = vrot.lane.b32.xlu0 %v1011, 90
        %v1080 = vpop.permute.xlu0 %1079
        %1081 = vrot.lane.b32.xlu0 %v1012, 90
        %v1082 = vpop.permute.xlu0 %1081
        %v1083 = vsel %vm951, %v1078, %v1080
        %v1084 = vsel %vm951, %v1080, %v1082
        %v1085 = vld [vmem:[%s4] sm:$0xf]
        %v1086 = vld [vmem:[%s5] sm:$0xf]
        %1088 = vset.pattern.permute.xlu0 0
        %1089 = vperm.xlu0 %1088, %v1086
        %v1090 = vpop.permute.xlu0 %1089
        %1092 = vrot.lane.b32.xlu0 %v1010, 111
        %v1093 = vpop.permute.xlu0 %1092
        %1094 = vrot.lane.b32.xlu0 %v1011, 111
        %v1095 = vpop.permute.xlu0 %1094
        %1096 = vrot.lane.b32.xlu0 %v1012, 111
        %v1097 = vpop.permute.xlu0 %1096
        %1098 = vrot.lane.b32.xlu0 %v1023, 111
        %v1099 = vpop.permute.xlu0 %1098
        %1100 = vrot.lane.b32.xlu0 %v1024, 111
        %v1101 = vpop.permute.xlu0 %1100
        %1102 = vrot.lane.b32.xlu0 %v1021, 111
        %v1103 = vpop.permute.xlu0 %1102
        %1104 = vrot.lane.b32.xlu0 %v1031, 111
        %v1105 = vpop.permute.xlu0 %1104
        %1106 = vrot.lane.b32.xlu0 %v1032, 111
        %v1107 = vpop.permute.xlu0 %1106
        %1108 = vrot.lane.b32.xlu0 %v1030, 111
        %v1109 = vpop.permute.xlu0 %1108
        %1110 = vrot.lane.b32.xlu0 %v1040, 111
        %v1111 = vpop.permute.xlu0 %1110
        %1112 = vrot.lane.b32.xlu0 %v1041, 111
        %v1113 = vpop.permute.xlu0 %1112
        %1114 = vrot.lane.b32.xlu0 %v1038, 111
        %v1115 = vpop.permute.xlu0 %1114
        %1116 = vrot.lane.b32.xlu0 %v1049, 111
        %v1117 = vpop.permute.xlu0 %1116
        %1118 = vrot.lane.b32.xlu0 %v1050, 111
        %v1119 = vpop.permute.xlu0 %1118
        %1120 = vrot.lane.b32.xlu0 %v1047, 111
        %v1121 = vpop.permute.xlu0 %1120
        %1122 = vrot.lane.b32.xlu0 %v1057, 111
        %v1123 = vpop.permute.xlu0 %1122
        %1124 = vrot.lane.b32.xlu0 %v1058, 111
        %v1125 = vpop.permute.xlu0 %1124
        %1126 = vrot.lane.b32.xlu0 %v1056, 111
        %v1127 = vpop.permute.xlu0 %1126
        %1128 = vrot.lane.b32.xlu0 %v1066, 111
        %v1129 = vpop.permute.xlu0 %1128
        %1130 = vrot.lane.b32.xlu0 %v1067, 111
        %v1131 = vpop.permute.xlu0 %1130
        %1132 = vrot.lane.b32.xlu0 %v1064, 111
        %v1133 = vpop.permute.xlu0 %1132
        %1134 = vrot.lane.b32.xlu0 %v1075, 111
        %v1135 = vpop.permute.xlu0 %1134
        %1136 = vrot.lane.b32.xlu0 %v1076, 111
        %v1137 = vpop.permute.xlu0 %1136
        %1138 = vrot.lane.b32.xlu0 %v1073, 111
        %v1139 = vpop.permute.xlu0 %1138
        %1140 = vrot.lane.b32.xlu0 %v1083, 111
        %v1141 = vpop.permute.xlu0 %1140
        %1142 = vrot.lane.b32.xlu0 %v1084, 111
        %v1143 = vpop.permute.xlu0 %1142
        %1144 = vrot.lane.b32.xlu0 %v1082, 111
        %v1145 = vpop.permute.xlu0 %1144
        %vm1146 = vcmask 908288
        %v1147 = vsel %vm1146, %v1093, %v1095
        %v1148 = vsel %vm1146, %v1095, %v1097
        %v1149 = vsel %vm1146, %v1099, %v1101
        %v1150 = vsel %vm1146, %v1101, %v1103
        %v1151 = vsel %vm1146, %v1105, %v1107
        %v1152 = vsel %vm1146, %v1107, %v1109
        %v1153 = vsel %vm1146, %v1111, %v1113
        %v1154 = vsel %vm1146, %v1113, %v1115
        %v1155 = vsel %vm1146, %v1117, %v1119
        %v1156 = vsel %vm1146, %v1119, %v1121
        %v1157 = vsel %vm1146, %v1123, %v1125
        %v1158 = vsel %vm1146, %v1125, %v1127
        %v1159 = vsel %vm1146, %v1129, %v1131
        %v1160 = vsel %vm1146, %v1131, %v1133
        %v1161 = vsel %vm1146, %v1135, %v1137
        %v1162 = vsel %vm1146, %v1137, %v1139
        %v1163 = vsel %vm1146, %v1141, %v1143
        %v1164 = vsel %vm1146, %v1143, %v1145
        %v1193 = vsel %vm949, %v1085, 0
        %1195 = vmatprep.subr.mxu0 %v1148
        %1196 = vmatpush1.msra.mxu0 %v1147
        %1197 = vmatprep.subr.mxu0 %v1150
        %1198 = vmatpush1.msra.mxu0 %v1149
        %1199 = vmatprep.subr.mxu0 %v1152
        %1200 = vmatpush1.msra.mxu0 %v1151
        %1201 = vmatprep.subr.mxu0 %v1154
        %1202 = vmatpush1.msra.mxu0 %v1153
        %1203 = vmatprep.subr.mxu0 %v1156
        %1204 = vmatpush1.msra.mxu0 %v1155
        %1205 = vmatprep.subr.mxu0 %v1158
        %1206 = vmatpush1.msra.mxu0 %v1157
        %1207 = vmatprep.subr.mxu0 %v1160
        %1208 = vmatpush1.msra.mxu0 %v1159
        %1209 = vmatprep.subr.mxu0 %v1162
        %1210 = vmatpush1.msra.mxu0 %v1161
        %1211 = vmatprep.subr.mxu0 %v1164
        %1212 = vmatpush1.msra.mxu0 %v1163
        %1213 = vmatprep.subr.mxu0 0.0
        %1214 = vmatpush1.msra.mxu0 0.0
        %1215 = vmatprep.subr.mxu0 0.0
        %1216 = vmatpush1.msra.mxu0 0.0
        %1217 = vmatprep.subr.mxu0 0.0
        %1218 = vmatpush1.msra.mxu0 0.0
        %1219 = vmatprep.subr.mxu0 0.0
        %1220 = vmatpush1.msra.mxu0 0.0
        %1221 = vmatprep.subr.mxu0 0.0
        %1222 = vmatpush1.msra.mxu0 0.0
        %1223 = vmatprep.subr.mxu0 0.0
        %1224 = vmatpush1.msra.mxu0 0.0
        %1225 = vmatprep.subr.mxu0 0.0
        %1226 = vmatpush1.msra.mxu0 0.0
        %1227 = vmatprep.subr.mxu0 0.0
        %1228 = vmatpush1.msra.mxu0 0.0
        %1229 = vmatprep.subr.mxu0 0.0
        %1230 = vmatpush1.msra.mxu0 0.0
        %1231 = vmatprep.subr.mxu0 0.0
        %1232 = vmatpush1.msra.mxu0 0.0
        %1233 = vmatprep.subr.mxu0 0.0
        %1234 = vmatpush1.msra.mxu0 0.0
        %1235 = vmatprep.subr.mxu0 0.0
        %1236 = vmatpush1.msra.mxu0 0.0
        %1237 = vmatprep.subr.mxu0 0.0
        %1238 = vmatpush1.msra.mxu0 0.0
        %1239 = vmatprep.subr.mxu0 0.0
        %1240 = vmatpush1.msra.mxu0 0.0
        %1241 = vmatprep.subr.mxu0 0.0
        %1242 = vmatpush1.msra.mxu0 0.0
        %1243 = vmatprep.subr.mxu0 0.0
        %1244 = vmatpush1.msra.mxu0 0.0
        %1245 = vmatprep.subr.mxu0 0.0
        %1246 = vmatpush1.msra.mxu0 0.0
        %1247 = vmatprep.subr.mxu0 0.0
        %1248 = vmatpush1.msra.mxu0 0.0
        %1249 = vmatprep.subr.mxu0 0.0
        %1250 = vmatpush1.msra.mxu0 0.0
        %1251 = vmatprep.subr.mxu0 0.0
        %1252 = vmatpush1.msra.mxu0 0.0
        %1253 = vmatprep.subr.mxu0 0.0
        %1254 = vmatpush1.msra.mxu0 0.0
        %1255 = vmatprep.subr.mxu0 0.0
        %1256 = vmatpush1.msra.mxu0 0.0
        %1257 = vmatprep.subr.mxu0 0.0
        %1258 = vmatpush1.msra.mxu0 0.0
        %1259 = vmatprep.mubr.f32.mxu0 0.0
        %1260 = vmatmul.mubr.f32.gmra.mrb[0].mxu0 %v1193
        %v1261 = vpop.f32.mrb[0].mxu0
        %v1262 = vadd.f32 %v1090, %v1261
        %v1263 = vpop.f32.mrb[0].mxu0
        %v1264 = vadd.f32 %v1090, %v1263
        %1265 = vdwg.mxu0
        %1266 = vmatprep.subr.mxu0 0.0
        %1267 = vmatpush1.msra.mxu0 %v1097
        %1268 = vmatprep.subr.mxu0 0.0
        %1269 = vmatpush1.msra.mxu0 %v1103
        %1270 = vmatprep.subr.mxu0 0.0
        %1271 = vmatpush1.msra.mxu0 %v1109
        %1272 = vmatprep.subr.mxu0 0.0
        %1273 = vmatpush1.msra.mxu0 %v1115
        %1274 = vmatprep.subr.mxu0 0.0
        %1275 = vmatpush1.msra.mxu0 %v1121
        %1276 = vmatprep.subr.mxu0 0.0
        %1277 = vmatpush1.msra.mxu0 %v1127
        %1278 = vmatprep.subr.mxu0 0.0
        %1279 = vmatpush1.msra.mxu0 %v1133
        %1280 = vmatprep.subr.mxu0 0.0
        %1281 = vmatpush1.msra.mxu0 %v1139
        %1282 = vmatprep.subr.mxu0 0.0
        %1283 = vmatpush1.msra.mxu0 %v1145
        %1284 = vmatprep.subr.mxu0 0.0
        %1285 = vmatpush1.msra.mxu0 0.0
        %1286 = vmatprep.subr.mxu0 0.0
        %1287 = vmatpush1.msra.mxu0 0.0
        %1288 = vmatprep.subr.mxu0 0.0
        %1289 = vmatpush1.msra.mxu0 0.0
        %1290 = vmatprep.subr.mxu0 0.0
        %1291 = vmatpush1.msra.mxu0 0.0
        %1292 = vmatprep.subr.mxu0 0.0
        %1293 = vmatpush1.msra.mxu0 0.0
        %1294 = vmatprep.subr.mxu0 0.0
        %1295 = vmatpush1.msra.mxu0 0.0
        %1296 = vmatprep.subr.mxu0 0.0
        %1297 = vmatpush1.msra.mxu0 0.0
        %1298 = vmatprep.subr.mxu0 0.0
        %1299 = vmatpush1.msra.mxu0 0.0
        %1300 = vmatprep.subr.mxu0 0.0
        %1301 = vmatpush1.msra.mxu0 0.0
        %1302 = vmatprep.subr.mxu0 0.0
        %1303 = vmatpush1.msra.mxu0 0.0
        %1304 = vmatprep.subr.mxu0 0.0
        %1305 = vmatpush1.msra.mxu0 0.0
        %1306 = vmatprep.subr.mxu0 0.0
        %1307 = vmatpush1.msra.mxu0 0.0
        %1308 = vmatprep.subr.mxu0 0.0
        %1309 = vmatpush1.msra.mxu0 0.0
        %1310 = vmatprep.subr.mxu0 0.0
        %1311 = vmatpush1.msra.mxu0 0.0
        %1312 = vmatprep.subr.mxu0 0.0
        %1313 = vmatpush1.msra.mxu0 0.0
        %1314 = vmatprep.subr.mxu0 0.0
        %1315 = vmatpush1.msra.mxu0 0.0
        %1316 = vmatprep.subr.mxu0 0.0
        %1317 = vmatpush1.msra.mxu0 0.0
        %1318 = vmatprep.subr.mxu0 0.0
        %1319 = vmatpush1.msra.mxu0 0.0
        %1320 = vmatprep.subr.mxu0 0.0
        %1321 = vmatpush1.msra.mxu0 0.0
        %1322 = vmatprep.subr.mxu0 0.0
        %1323 = vmatpush1.msra.mxu0 0.0
        %1324 = vmatprep.subr.mxu0 0.0
        %1325 = vmatpush1.msra.mxu0 0.0
        %1326 = vmatprep.subr.mxu0 0.0
        %1327 = vmatpush1.msra.mxu0 0.0
        %1328 = vmatprep.subr.mxu0 0.0
        %1329 = vmatpush1.msra.mxu0 0.0
        %1330 = vmatprep.mubr.f32.mxu0 0.0
        %1331 = vmatmul.mubr.f32.gmra.mrb[0].mxu0 %v1193
        %v1332 = vpop.f32.mrb[0].mxu0
        %v1333 = vadd.f32 %v1090, %v1332
        %v1334 = vpop.f32.mrb[0].mxu0
        %1335 = vdwg.mxu0
        %v1336 = vmax.f32 %v1262, 0.0
        %v1337 = vmax.f32 %v1264, 0.0
        %v1338 = vmax.f32 %v1333, 0.0
        %v1339 = vld [vmem:[%s3] sm:$0x7]
        %v1341 = vlaneseq
        %v1342 = vshrl.u32 %v1341, 7
        %v1343 = vsub.s32 0, %v1342
        %v1344 = vrot.slane %v1339, %v1343
        %v1345 = vlaneseq
        %v1346 = vshrl.u32 %v1345, 7
        %v1347 = vsub.s32 1, %v1346
        %v1348 = vrot.slane %v1339, %v1347
        %v1349 = vlaneseq
        %v1350 = vshrl.u32 %v1349, 7
        %v1351 = vsub.s32 2, %v1350
        %v1352 = vrot.slane %v1339, %v1351
        %v1356 = vmul.f32 %v1336, %v1344
        %v1357 = vmul.f32 %v1337, %v1348
        %v1358 = vmul.f32 %v1338, %v1352
        %1362 = vrot.lane.b32.xlu0 %v1356, 36
        %v1363 = vpop.permute.xlu0 %1362
        %1364 = vrot.lane.b32.xlu0 %v1357, 36
        %v1365 = vpop.permute.xlu0 %1364
        %1366 = vrot.lane.b32.xlu0 %v1358, 36
        %v1367 = vpop.permute.xlu0 %1366
        %vm1368 = vcmask 293888
        %v1369 = vsel %vm1368, %v1363, %v1365
        %v1370 = vsel %vm1368, %v1365, %v1367
        %v1374 = vsel %vm1368, 0.0, %v1363
        %vm1375 = vcmask 850944
        %v1376 = vsel %vm1375, %v1370, 0.0
        %v1379 = vrot.slane %v1374, 4
        %v1380 = vrot.slane %v1369, 4
        %v1381 = vrot.slane %v1376, 4
        %1382 = vrot.lane.b32.xlu0 %v1379, 127
        %v1383 = vpop.permute.xlu0 %1382
        %1384 = vrot.lane.b32.xlu0 %v1380, 127
        %v1385 = vpop.permute.xlu0 %1384
        %1386 = vrot.lane.b32.xlu0 %v1381, 127
        %v1387 = vpop.permute.xlu0 %1386
        %v1388 = vsel %vm1022, %v1383, %v1385
        %v1389 = vsel %vm1022, %v1385, %v1387
        %1393 = vrot.lane.b32.xlu0 %v1374, 126
        %v1394 = vpop.permute.xlu0 %1393
        %1395 = vrot.lane.b32.xlu0 %v1369, 126
        %v1396 = vpop.permute.xlu0 %1395
        %1397 = vrot.lane.b32.xlu0 %v1376, 126
        %v1398 = vpop.permute.xlu0 %1397
        %v1399 = vsel %vm955, %v1394, %v1396
        %v1400 = vsel %vm955, %v1396, %v1398
        %1404 = vrot.lane.b32.xlu0 %v1379, 110
        %v1405 = vpop.permute.xlu0 %1404
        %1406 = vrot.lane.b32.xlu0 %v1380, 110
        %v1407 = vpop.permute.xlu0 %1406
        %1408 = vrot.lane.b32.xlu0 %v1381, 110
        %v1409 = vpop.permute.xlu0 %1408
        %v1410 = vsel %vm1039, %v1405, %v1407
        %v1411 = vsel %vm1039, %v1407, %v1409
        %1415 = vrot.lane.b32.xlu0 %v1374, 109
        %v1416 = vpop.permute.xlu0 %1415
        %1417 = vrot.lane.b32.xlu0 %v1369, 109
        %v1418 = vpop.permute.xlu0 %1417
        %1419 = vrot.lane.b32.xlu0 %v1376, 109
        %v1420 = vpop.permute.xlu0 %1419
        %v1421 = vsel %vm1048, %v1416, %v1418
        %v1422 = vsel %vm1048, %v1418, %v1420
        %1426 = vrot.lane.b32.xlu0 %v1379, 108
        %v1427 = vpop.permute.xlu0 %1426
        %1428 = vrot.lane.b32.xlu0 %v1380, 108
        %v1429 = vpop.permute.xlu0 %1428
        %1430 = vrot.lane.b32.xlu0 %v1381, 108
        %v1431 = vpop.permute.xlu0 %1430
        %v1432 = vsel %vm953, %v1427, %v1429
        %v1433 = vsel %vm953, %v1429, %v1431
        %1437 = vrot.lane.b32.xlu0 %v1374, 92
        %v1438 = vpop.permute.xlu0 %1437
        %1439 = vrot.lane.b32.xlu0 %v1369, 92
        %v1440 = vpop.permute.xlu0 %1439
        %1441 = vrot.lane.b32.xlu0 %v1376, 92
        %v1442 = vpop.permute.xlu0 %1441
        %v1443 = vsel %vm1065, %v1438, %v1440
        %v1444 = vsel %vm1065, %v1440, %v1442
        %1448 = vrot.lane.b32.xlu0 %v1379, 91
        %v1449 = vpop.permute.xlu0 %1448
        %1450 = vrot.lane.b32.xlu0 %v1380, 91
        %v1451 = vpop.permute.xlu0 %1450
        %1452 = vrot.lane.b32.xlu0 %v1381, 91
        %v1453 = vpop.permute.xlu0 %1452
        %v1454 = vsel %vm1074, %v1449, %v1451
        %v1455 = vsel %vm1074, %v1451, %v1453
        %1459 = vrot.lane.b32.xlu0 %v1374, 90
        %v1460 = vpop.permute.xlu0 %1459
        %1461 = vrot.lane.b32.xlu0 %v1369, 90
        %v1462 = vpop.permute.xlu0 %1461
        %1463 = vrot.lane.b32.xlu0 %v1376, 90
        %v1464 = vpop.permute.xlu0 %1463
        %v1465 = vsel %vm951, %v1460, %v1462
        %v1466 = vsel %vm951, %v1462, %v1464
        %v1467 = vsel %vm1009, %v1374, %v1388
        %v1468 = vsel %vm1009, %v1369, %v1389
        %v1469 = vsel %vm1009, %v1376, %v1387
        %v1470 = vsel %vm1009, %v1399, %v1410
        %v1471 = vsel %vm1009, %v1400, %v1411
        %v1472 = vsel %vm1009, %v1398, %v1409
        %v1473 = vsel %vm1009, %v1421, %v1432
        %v1474 = vsel %vm1009, %v1422, %v1433
        %v1475 = vsel %vm1009, %v1420, %v1431
        %v1476 = vsel %vm1009, %v1443, %v1454
        %v1477 = vsel %vm1009, %v1444, %v1455
        %v1478 = vsel %vm1009, %v1442, %v1453
        %v1479 = vld [vmem:[%s6] sm:$0xf]
        %v1480 = vld [vmem:[%s7] sm:$0xf]
        %1482 = vset.pattern.permute.xlu0 0
        %1483 = vperm.xlu0 %1482, %v1480
        %v1484 = vpop.permute.xlu0 %1483
        %1498 = vrot.lane.b32.xlu0 %v1467, 111
        %v1499 = vpop.permute.xlu0 %1498
        %1500 = vrot.lane.b32.xlu0 %v1468, 111
        %v1501 = vpop.permute.xlu0 %1500
        %1502 = vrot.lane.b32.xlu0 %v1469, 111
        %v1503 = vpop.permute.xlu0 %1502
        %1504 = vrot.lane.b32.xlu0 %v1470, 111
        %v1505 = vpop.permute.xlu0 %1504
        %1506 = vrot.lane.b32.xlu0 %v1471, 111
        %v1507 = vpop.permute.xlu0 %1506
        %1508 = vrot.lane.b32.xlu0 %v1472, 111
        %v1509 = vpop.permute.xlu0 %1508
        %1510 = vrot.lane.b32.xlu0 %v1473, 111
        %v1511 = vpop.permute.xlu0 %1510
        %1512 = vrot.lane.b32.xlu0 %v1474, 111
        %v1513 = vpop.permute.xlu0 %1512
        %1514 = vrot.lane.b32.xlu0 %v1475, 111
        %v1515 = vpop.permute.xlu0 %1514
        %1516 = vrot.lane.b32.xlu0 %v1476, 111
        %v1517 = vpop.permute.xlu0 %1516
        %1518 = vrot.lane.b32.xlu0 %v1477, 111
        %v1519 = vpop.permute.xlu0 %1518
        %1520 = vrot.lane.b32.xlu0 %v1478, 111
        %v1521 = vpop.permute.xlu0 %1520
        %1522 = vrot.lane.b32.xlu0 %v1465, 111
        %v1523 = vpop.permute.xlu0 %1522
        %1524 = vrot.lane.b32.xlu0 %v1466, 111
        %v1525 = vpop.permute.xlu0 %1524
        %1526 = vrot.lane.b32.xlu0 %v1464, 111
        %v1527 = vpop.permute.xlu0 %1526
        %v1528 = vsel %vm1146, %v1499, %v1501
        %v1529 = vsel %vm1146, %v1501, %v1503
        %v1530 = vsel %vm1146, %v1505, %v1507
        %v1531 = vsel %vm1146, %v1507, %v1509
        %v1532 = vsel %vm1146, %v1511, %v1513
        %v1533 = vsel %vm1146, %v1513, %v1515
        %v1534 = vsel %vm1146, %v1517, %v1519
        %v1535 = vsel %vm1146, %v1519, %v1521
        %v1536 = vsel %vm1146, %v1523, %v1525
        %v1537 = vsel %vm1146, %v1525, %v1527
        %v1551 = vsel %vm1368, %v1479, 0
        %v1553 = vsel %vm1009, %v1536, 0
        %v1555 = vsel %vm1009, %v1537, 0
        %v1557 = vsel %vm1009, %v1527, 0
        %1559 = vmatprep.subr.mxu0 %v1529
        %1560 = vmatpush1.msra.mxu0 %v1528
        %1561 = vmatprep.subr.mxu0 %v1531
        %1562 = vmatpush1.msra.mxu0 %v1530
        %1563 = vmatprep.subr.mxu0 %v1533
        %1564 = vmatpush1.msra.mxu0 %v1532
        %1565 = vmatprep.subr.mxu0 %v1535
        %1566 = vmatpush1.msra.mxu0 %v1534
        %1567 = vmatprep.subr.mxu0 %v1555
        %1568 = vmatpush1.msra.mxu0 %v1553
        %1569 = vmatprep.subr.mxu0 0.0
        %1570 = vmatpush1.msra.mxu0 0.0
        %1571 = vmatprep.subr.mxu0 0.0
        %1572 = vmatpush1.msra.mxu0 0.0
        %1573 = vmatprep.subr.mxu0 0.0
        %1574 = vmatpush1.msra.mxu0 0.0
        %1575 = vmatprep.subr.mxu0 0.0
        %1576 = vmatpush1.msra.mxu0 0.0
        %1577 = vmatprep.subr.mxu0 0.0
        %1578 = vmatpush1.msra.mxu0 0.0
        %1579 = vmatprep.subr.mxu0 0.0
        %1580 = vmatpush1.msra.mxu0 0.0
        %1581 = vmatprep.subr.mxu0 0.0
        %1582 = vmatpush1.msra.mxu0 0.0
        %1583 = vmatprep.subr.mxu0 0.0
        %1584 = vmatpush1.msra.mxu0 0.0
        %1585 = vmatprep.subr.mxu0 0.0
        %1586 = vmatpush1.msra.mxu0 0.0
        %1587 = vmatprep.subr.mxu0 0.0
        %1588 = vmatpush1.msra.mxu0 0.0
        %1589 = vmatprep.subr.mxu0 0.0
        %1590 = vmatpush1.msra.mxu0 0.0
        %1591 = vmatprep.subr.mxu0 0.0
        %1592 = vmatpush1.msra.mxu0 0.0
        %1593 = vmatprep.subr.mxu0 0.0
        %1594 = vmatpush1.msra.mxu0 0.0
        %1595 = vmatprep.subr.mxu0 0.0
        %1596 = vmatpush1.msra.mxu0 0.0
        %1597 = vmatprep.subr.mxu0 0.0
        %1598 = vmatpush1.msra.mxu0 0.0
        %1599 = vmatprep.subr.mxu0 0.0
        %1600 = vmatpush1.msra.mxu0 0.0
        %1601 = vmatprep.subr.mxu0 0.0
        %1602 = vmatpush1.msra.mxu0 0.0
        %1603 = vmatprep.subr.mxu0 0.0
        %1604 = vmatpush1.msra.mxu0 0.0
        %1605 = vmatprep.subr.mxu0 0.0
        %1606 = vmatpush1.msra.mxu0 0.0
        %1607 = vmatprep.subr.mxu0 0.0
        %1608 = vmatpush1.msra.mxu0 0.0
        %1609 = vmatprep.subr.mxu0 0.0
        %1610 = vmatpush1.msra.mxu0 0.0
        %1611 = vmatprep.subr.mxu0 0.0
        %1612 = vmatpush1.msra.mxu0 0.0
        %1613 = vmatprep.subr.mxu0 0.0
        %1614 = vmatpush1.msra.mxu0 0.0
        %1615 = vmatprep.subr.mxu0 0.0
        %1616 = vmatpush1.msra.mxu0 0.0
        %1617 = vmatprep.subr.mxu0 0.0
        %1618 = vmatpush1.msra.mxu0 0.0
        %1619 = vmatprep.subr.mxu0 0.0
        %1620 = vmatpush1.msra.mxu0 0.0
        %1621 = vmatprep.subr.mxu0 0.0
        %1622 = vmatpush1.msra.mxu0 0.0
        %1623 = vmatprep.mubr.f32.mxu0 0.0
        %1624 = vmatmul.mubr.f32.gmra.mrb[0].mxu0 %v1551
        %v1625 = vpop.f32.mrb[0].mxu0
        %v1626 = vadd.f32 %v1484, %v1625
        %v1627 = vpop.f32.mrb[0].mxu0
        %v1628 = vadd.f32 %v1484, %v1627
        %1629 = vdwg.mxu0
        %1630 = vmatprep.subr.mxu0 0.0
        %1631 = vmatpush1.msra.mxu0 %v1503
        %1632 = vmatprep.subr.mxu0 0.0
        %1633 = vmatpush1.msra.mxu0 %v1509
        %1634 = vmatprep.subr.mxu0 0.0
        %1635 = vmatpush1.msra.mxu0 %v1515
        %1636 = vmatprep.subr.mxu0 0.0
        %1637 = vmatpush1.msra.mxu0 %v1521
        %1638 = vmatprep.subr.mxu0 0.0
        %1639 = vmatpush1.msra.mxu0 %v1557
        %1640 = vmatprep.subr.mxu0 0.0
        %1641 = vmatpush1.msra.mxu0 0.0
        %1642 = vmatprep.subr.mxu0 0.0
        %1643 = vmatpush1.msra.mxu0 0.0
        %1644 = vmatprep.subr.mxu0 0.0
        %1645 = vmatpush1.msra.mxu0 0.0
        %1646 = vmatprep.subr.mxu0 0.0
        %1647 = vmatpush1.msra.mxu0 0.0
        %1648 = vmatprep.subr.mxu0 0.0
        %1649 = vmatpush1.msra.mxu0 0.0
        %1650 = vmatprep.subr.mxu0 0.0
        %1651 = vmatpush1.msra.mxu0 0.0
        %1652 = vmatprep.subr.mxu0 0.0
        %1653 = vmatpush1.msra.mxu0 0.0
        %1654 = vmatprep.subr.mxu0 0.0
        %1655 = vmatpush1.msra.mxu0 0.0
        %1656 = vmatprep.subr.mxu0 0.0
        %1657 = vmatpush1.msra.mxu0 0.0
        %1658 = vmatprep.subr.mxu0 0.0
        %1659 = vmatpush1.msra.mxu0 0.0
        %1660 = vmatprep.subr.mxu0 0.0
        %1661 = vmatpush1.msra.mxu0 0.0
        %1662 = vmatprep.subr.mxu0 0.0
        %1663 = vmatpush1.msra.mxu0 0.0
        %1664 = vmatprep.subr.mxu0 0.0
        %1665 = vmatpush1.msra.mxu0 0.0
        %1666 = vmatprep.subr.mxu0 0.0
        %1667 = vmatpush1.msra.mxu0 0.0
        %1668 = vmatprep.subr.mxu0 0.0
        %1669 = vmatpush1.msra.mxu0 0.0
        %1670 = vmatprep.subr.mxu0 0.0
        %1671 = vmatpush1.msra.mxu0 0.0
        %1672 = vmatprep.subr.mxu0 0.0
        %1673 = vmatpush1.msra.mxu0 0.0
        %1674 = vmatprep.subr.mxu0 0.0
        %1675 = vmatpush1.msra.mxu0 0.0
        %1676 = vmatprep.subr.mxu0 0.0
        %1677 = vmatpush1.msra.mxu0 0.0
        %1678 = vmatprep.subr.mxu0 0.0
        %1679 = vmatpush1.msra.mxu0 0.0
        %1680 = vmatprep.subr.mxu0 0.0
        %1681 = vmatpush1.msra.mxu0 0.0
        %1682 = vmatprep.subr.mxu0 0.0
        %1683 = vmatpush1.msra.mxu0 0.0
        %1684 = vmatprep.subr.mxu0 0.0
        %1685 = vmatpush1.msra.mxu0 0.0
        %1686 = vmatprep.subr.mxu0 0.0
        %1687 = vmatpush1.msra.mxu0 0.0
        %1688 = vmatprep.subr.mxu0 0.0
        %1689 = vmatpush1.msra.mxu0 0.0
        %1690 = vmatprep.subr.mxu0 0.0
        %1691 = vmatpush1.msra.mxu0 0.0
        %1692 = vmatprep.subr.mxu0 0.0
        %1693 = vmatpush1.msra.mxu0 0.0
        %1694 = vmatprep.mubr.f32.mxu0 0.0
        %1695 = vmatmul.mubr.f32.gmra.mrb[0].mxu0 %v1551
        %v1696 = vpop.f32.mrb[0].mxu0
        %v1697 = vadd.f32 %v1484, %v1696
        %v1698 = vpop.f32.mrb[0].mxu0
        %1699 = vdwg.mxu0
        %v1700 = vmax.f32 %v1626, 0.0
        %v1701 = vmax.f32 %v1628, 0.0
        %v1702 = vmax.f32 %v1697, 0.0
        %v1705 = vcombine.low %v1700, %v1701
        %1707 = vst [vmem:[%s313] sm:$0xff] %v1705
        %vm1708 = vcmask 551936
        %1709 = vst.msk [vmem:[%s313 + $0x8] sm:$0xf] %vm1708, %v1702
        %s1710 = sand.u32 %s208, 1
        %s1711 = scalar_lea.sflag [#allocation3], %s1710
        %s1712 = sand.u32 %s208, 1
        %s1713 = smul.addr %s1712, 12
        %s1714 = scalar_lea.vmem [#allocation2], %s1713
        // Predicated region
        $region53: #{tpu_custom_call.1} parent=51 // pred_check
          %p1715 = pneg %p218
        $region54: #{tpu_custom_call.1} parent=51 // pred_check_branch
          %1717 = sbr.rel (%p1715) target = $region56
        $region55: #{tpu_custom_call.1} parent=51 // pred_region
          %s1719 = ssub.s32 192, 192
          %1720 = vsyncadd %s1711, %s1719
          %s1721 = smul.addr %s22, 3
          %s1722 = smul.addr %s1721, 64
          %s1723 = scalar_lea.hbm %s8, %s1722
          %s1725 = sshll.u32 %s1714, 4
          %s1726 = int_to_ptr.vmem [resolvable:$true] %s1725
          %1728 = dma.vmem_to_hbm [thread:$0]  %s1726, 192, %s1723, %s1711
        $region56: #{tpu_custom_call.1} parent=51 // pred_fallthru
          _
      $region52: #{tpu_custom_call.1} parent=5 // pred_fallthru
        _
      %p1729 = scmp.le.s32.totalorder 2, %s17
      // Predicated region
      $region57: #{tpu_custom_call.1} parent=5 // pred_check
        %p1730 = pneg %p1729
      $region58: #{tpu_custom_call.1} parent=5 // pred_check_branch
        %1732 = sbr.rel (%p1730) target = $region60
      $region59: #{tpu_custom_call.1} parent=5 // pred_region
        %s1733 = ssub.s32 %s17, 2
        // Predicated region
        $region61: #{tpu_custom_call.1} parent=59 // pred_check
          %p1734 = pneg %p224
        $region62: #{tpu_custom_call.1} parent=59 // pred_check_branch
          %1736 = sbr.rel (%p1734) target = $region64
        $region63: #{tpu_custom_call.1} parent=59 // pred_region
          %s1737 = sand.u32 %s209, 1
          %s1738 = scalar_lea.sflag [#allocation3], %s1737
          %s1739 = sand.u32 %s209, 1
          %s1740 = smul.addr %s1739, 12
          %s1741 = scalar_lea.vmem [#allocation2], %s1740
          %1742 = dma.done %s1738, 192
        $region64: #{tpu_custom_call.1} parent=59 // pred_fallthru
          _
      $region60: #{tpu_custom_call.1} parent=5 // pred_fallthru
        _
    $region6: #{tpu_custom_call.1} parent=1 // loop_footer
      %s21 = sadd.s32 1, %s17
    $region7: #{tpu_custom_call.1} parent=1 // loop_footer_branch
      %16 = sbr.rel target = $region3
    $region8: #{tpu_custom_call.1} parent=1 // loop_exit
      _
    %1743 = vsyncpa [#allocation3], 1
    %s1744 = scalar_lea.sflag [#allocation3], 1
    %1745 = vsyncpa %s1744, 1

</llo_original>
